<compile_context>
chip_gen: v7x
topology: tpu7x:2x2x1
jax: 0.10.0
libtpu: 0.0.40
codegen_flags: <defaults>
</compile_context>

<pallas_src>
import math

import numpy as np
import jax
import jax.numpy as jnp
from jax import lax
from jax.experimental import pallas as pl
from jax.experimental.pallas import tpu as pltpu


def _topdown_lstm_kernel(conn_ref, x2d_ref, w_ref, b_ref, vfoz_ref, out_ref, c_scr):
    """Kernel refs:
      conn_ref : SMEM (B, N) int32   parent id per (batch, node); parent(t) < t
      x2d_ref  : VMEM (N*B, I) bf16  node-major flattened tree embeddings
      w_ref    : VMEM (I, 3H) bf16   inp_mapping weight (transposed: x @ W)
      b_ref    : VMEM (1, 3H) f32    inp_mapping bias
      vfoz_ref : VMEM (H, 3H) bf16   [v_f | v_o | v_z] fused transition matrix
      out_ref  : VMEM (N, B, H) f32  hidden per node (doubles as recurrent h buffer)
      c_scr    : VMEM (N, B, H) f32  recurrent cell state
    """
    N, B, H = out_ref.shape

    # ---- input mapping: one fused MXU matmul over every (node, batch) row ----
    # bf16 operands, f32 accumulation (default TPU matmul behaviour for f32 nets)
    pre = jnp.dot(x2d_ref[...], w_ref[...],
                  preferred_element_type=jnp.float32) + b_ref[...]      # (N*B, 3H) f32

    def cell(gates, parent_c):
        f = jax.nn.sigmoid(gates[:, :H])
        o = jax.nn.sigmoid(gates[:, H:2 * H])
        z = jnp.tanh(gates[:, 2 * H:])
        c = z * (1.0 - f) if parent_c is None else parent_c * f + z * (1.0 - f)
        h = o * jnp.tanh(c)
        return h, c

    # ---- node 0: no parent ----
    h0, c0 = cell(pre[0:B, :], None)
    out_ref[0] = h0
    c_scr[0] = c0

    # ---- statically unrolled top-down recurrence ----
    # parent(t) < t, so the gathered rows are always already written; no
    # zero-init of the state buffers is required.
    # TODO(synk): for large node counts switch to lax.fori_loop with a VMEM
    # scratch for `pre` and pl.ds-based dynamic slicing instead of unrolling;
    # for v7x + realistic batch, also add a parallel batch grid axis.
    for t in range(1, N):
        rows_h, rows_c = [], []
        for bi in range(B):                              # small batch: static unroll
            pid = conn_ref[bi, t]                        # SMEM scalar parent id
            rows_h.append(out_ref[pid][bi:bi + 1, :])    # (1, H) parent hidden
            rows_c.append(c_scr[pid][bi:bi + 1, :])      # (1, H) parent cell
        parent_h = jnp.concatenate(rows_h, axis=0)       # (B, H)
        parent_c = jnp.concatenate(rows_c, axis=0)       # (B, H)

        # fused gate matmul: (B, H) @ (H, 3H) against [v_f | v_o | v_z]
        gates = jnp.dot(parent_h.astype(vfoz_ref.dtype), vfoz_ref[...],
                        preferred_element_type=jnp.float32)
        gates = gates + pre[t * B:(t + 1) * B, :]

        h, c = cell(gates, parent_c)
        out_ref[t] = h
        c_scr[t] = c


def topdown_lstm_encoder(tree_embedding, node_connection, node_mask, w, b, vf, vo, vz):
    """tree_embedding: (B, N, I) f32; node_connection: (B, N) int parent ids
    (parent(t) < t for t >= 1; node 0's parent is ignored, as in PyTorch).
    Returns tree_h: (B, N, H) f32 — the first output of TopDownLSTMEncoder.forward."""
    B, N, I = tree_embedding.shape
    H = vf.shape[0]
    del node_mask  # only carried through the returned state tuple; no effect on tree_h
    # TODO(synk): incremental re-encoding from tree_hx (host-driven start_node) not implemented.

    # glue: node-major flatten; matmul operands pre-cast to bf16 (f32 accumulation in-kernel)
    x2d = jnp.transpose(tree_embedding, (1, 0, 2)).reshape(N * B, I).astype(jnp.bfloat16)
    w_bf = w.astype(jnp.bfloat16)
    vfoz = jnp.concatenate([vf, vo, vz], axis=1).astype(jnp.bfloat16)   # (H, 3H)
    b2d = b.reshape(1, 3 * H).astype(jnp.float32)
    conn = node_connection.astype(jnp.int32)                            # (B, N)

    out_nbh = pl.pallas_call(
        _topdown_lstm_kernel,
        out_shape=jax.ShapeDtypeStruct((N, B, H), jnp.float32),
        in_specs=[
            pl.BlockSpec(memory_space=pltpu.MemorySpace.SMEM),   # parent-id table
            pl.BlockSpec(memory_space=pltpu.MemorySpace.VMEM),   # x2d
            pl.BlockSpec(memory_space=pltpu.MemorySpace.VMEM),   # W
            pl.BlockSpec(memory_space=pltpu.MemorySpace.VMEM),   # bias
            pl.BlockSpec(memory_space=pltpu.MemorySpace.VMEM),   # [v_f|v_o|v_z]
        ],
        out_specs=pl.BlockSpec(memory_space=pltpu.MemorySpace.VMEM),
        scratch_shapes=[pltpu.VMEM((N, B, H), jnp.float32)],     # cell state
        compiler_params=pltpu.CompilerParams(vmem_limit_bytes=32 * 1024 * 1024),
    )(conn, x2d, w_bf, b2d, vfoz)

    return jnp.transpose(out_nbh, (1, 0, 2))                     # (B, N, H)


def reference_forward(tree_embedding, node_connection, w, b, vf, vo, vz, *, bf16_matmul_inputs):
    """Pure-JAX transcription of TopDownLSTMEncoder.forward (tree_hx=None, dropout=0).
    bf16_matmul_inputs=True mirrors the kernel's arithmetic (bf16 MXU operands,
    f32 accumulation); False is the full-f32 (PyTorch-faithful) forward."""
    B, N, I = tree_embedding.shape
    H = vf.shape[0]
    if bf16_matmul_inputs:
        def mm(a, m):
            return jnp.matmul(a.astype(jnp.bfloat16), m.astype(jnp.bfloat16),
                              preferred_element_type=jnp.float32)
    else:
        def mm(a, m):
            return jnp.matmul(a, m, precision=lax.Precision.HIGHEST)

    pre = mm(tree_embedding, w) + b                                # (B, N, 3H)
    f_all, o_all, z_all = pre[..., :H], pre[..., H:2 * H], pre[..., 2 * H:]
    bi = jnp.arange(B)
    hs, cs = [], []
    for t in range(N):
        f_, o_, z_ = f_all[:, t], o_all[:, t], z_all[:, t]
        if t > 0:
            hstack = jnp.stack(hs, axis=1)
            cstack = jnp.stack(cs, axis=1)
            pid = node_connection[:, t]
            ph = hstack[bi, pid]
            pc = cstack[bi, pid]
            f_ = mm(ph, vf) + f_
            o_ = mm(ph, vo) + o_
            z_ = mm(ph, vz) + z_
        f = jax.nn.sigmoid(f_)
        o = jax.nn.sigmoid(o_)
        z = jnp.tanh(z_)
        c = pc * f + z * (1.0 - f) if t > 0 else z * (1.0 - f)
        h = o * jnp.tanh(c)
        hs.append(h)
        cs.append(c)
    return jnp.stack(hs, axis=1)


if __name__ == "__main__":
    # small, module-consistent shapes
    B, N, I, H = 2, 8, 16, 32          # batch, node_num, input_sz, hidden_sz
    R = H                              # transition_matrix_rank == 0 -> hidden_sz

    key = jax.random.PRNGKey(0)
    kx, kw, kb, kf, ko, kz, kc = jax.random.split(key, 7)

    # deterministic "parameters" (synthetic init; shapes per __init__)
    wa = 1.0 / math.sqrt(I)
    w = jax.random.uniform(kw, (I, 3 * H), jnp.float32, -wa, wa)       # inp_mapping.weight^T
    b = jax.random.uniform(kb, (3 * H,), jnp.float32, -wa, wa)         # inp_mapping.bias
    ta = 1.0 / math.sqrt(H)
    tf_ = jax.random.uniform(kf, (R, H), jnp.float32, -ta, ta)         # hid_trans_f
    to_ = jax.random.uniform(ko, (R, H), jnp.float32, -ta, ta)         # hid_trans_o
    tz_ = jax.random.uniform(kz, (R, H), jnp.float32, -ta, ta)         # hid_trans_z
    vf = tf_.T @ tf_                                                   # v_f: (H, H)
    vo = to_.T @ to_
    vz = tz_.T @ tz_

    # deterministic inputs
    tree_embedding = jax.random.normal(kx, (B, N, I), jnp.float32)
    # valid top-down tree: parent(i) < i for i >= 1, node 0's parent is ignored
    cols = [jnp.zeros((B,), jnp.int32)]
    for i in range(1, N):
        cols.append(jax.random.randint(jax.random.fold_in(kc, i), (B,), 0, i, dtype=jnp.int32))
    node_connection = jnp.stack(cols, axis=1)                          # (B, N)
    node_mask = jnp.ones((B, N), jnp.int32)

    out = jax.block_until_ready(
        topdown_lstm_encoder(tree_embedding, node_connection, node_mask, w, b, vf, vo, vz))
    assert out.shape == (B, N, H), out.shape

    # strict check vs a reference using the same arithmetic as the kernel
    ref_matched = jax.block_until_ready(
        reference_forward(tree_embedding, node_connection, w, b, vf, vo, vz,
                          bf16_matmul_inputs=True))
    np.testing.assert_allclose(np.asarray(out), np.asarray(ref_matched), rtol=1e-3, atol=1e-3)

    # sanity check vs the full-f32 forward: bf16-MXU rounding stays small
    ref_f32 = jax.block_until_ready(
        reference_forward(tree_embedding, node_connection, w, b, vf, vo, vz,
                          bf16_matmul_inputs=False))
    np.testing.assert_allclose(np.asarray(out), np.asarray(ref_f32), rtol=2e-2, atol=2e-2)

    print("KERNEL_OK")
</pallas_src>

<mosaic_0001>
module attributes {stable_mosaic.version = 11 : i64} {
  func.func @_topdown_lstm_kernel(%arg0: memref<2x8xi32, #tpu.memory_space<smem>>, %arg1: memref<16x16xbf16, #tpu.memory_space<vmem>>, %arg2: memref<16x96xbf16, #tpu.memory_space<vmem>>, %arg3: memref<1x96xf32, #tpu.memory_space<vmem>>, %arg4: memref<32x96xbf16, #tpu.memory_space<vmem>>, %arg5: memref<8x2x32xf32, #tpu.memory_space<vmem>>, %arg6: memref<8x2x32xf32, #tpu.memory_space<vmem>>) attributes {dimension_semantics = [], scalar_prefetch = 0 : i64, scratch_operands = 1 : i64, tpu.core_type = #tpu.core_type<tc>} {
    %c0 = arith.constant 0 : index
    %c0_0 = arith.constant 0 : index
    %0 = vector.load %arg1[%c0, %c0_0] : memref<16x16xbf16, #tpu.memory_space<vmem>>, vector<16x16xbf16>
    %c0_1 = arith.constant 0 : index
    %c0_2 = arith.constant 0 : index
    %1 = vector.load %arg2[%c0_1, %c0_2] : memref<16x96xbf16, #tpu.memory_space<vmem>>, vector<16x96xbf16>
    %cst = arith.constant dense<0.000000e+00> : vector<16x96xf32>
    %2 = tpu.matmul %0, %1, %cst {dimension_numbers = #tpu.dot_dimension_numbers<[1], [0], [0], [1], [0, 0, 1, 1], [], []>} : vector<16x16xbf16>, vector<16x96xbf16>, vector<16x96xf32> -> vector<16x96xf32>
    %c0_3 = arith.constant 0 : index
    %c0_4 = arith.constant 0 : index
    %3 = vector.load %arg3[%c0_3, %c0_4] : memref<1x96xf32, #tpu.memory_space<vmem>>, vector<1x96xf32>
    %4 = vector.broadcast %3 : vector<1x96xf32> to vector<16x96xf32>
    %5 = arith.addf %2, %4 : vector<16x96xf32>
    %6 = vector.extract_strided_slice %5 {offsets = [0, 0], sizes = [2, 96], strides = [1, 1]} : vector<16x96xf32> to vector<2x96xf32>
    %7 = vector.extract_strided_slice %6 {offsets = [0, 0], sizes = [2, 32], strides = [1, 1]} : vector<2x96xf32> to vector<2x32xf32>
    %8 = arith.negf %7 : vector<2x32xf32>
    %9 = math.exp %8 : vector<2x32xf32>
    %cst_5 = arith.constant 1.000000e+00 : f32
    %10 = vector.broadcast %cst_5 : f32 to vector<2x32xf32>
    %11 = arith.addf %10, %9 : vector<2x32xf32>
    %12 = arith.divf %10, %11 : vector<2x32xf32>
    %13 = vector.extract_strided_slice %6 {offsets = [0, 32], sizes = [2, 32], strides = [1, 1]} : vector<2x96xf32> to vector<2x32xf32>
    %14 = arith.negf %13 : vector<2x32xf32>
    %15 = math.exp %14 : vector<2x32xf32>
    %cst_6 = arith.constant 1.000000e+00 : f32
    %16 = vector.broadcast %cst_6 : f32 to vector<2x32xf32>
    %17 = arith.addf %16, %15 : vector<2x32xf32>
    %18 = arith.divf %16, %17 : vector<2x32xf32>
    %19 = vector.extract_strided_slice %6 {offsets = [0, 64], sizes = [2, 32], strides = [1, 1]} : vector<2x96xf32> to vector<2x32xf32>
    %20 = math.tanh %19 : vector<2x32xf32>
    %cst_7 = arith.constant 1.000000e+00 : f32
    %21 = vector.broadcast %cst_7 : f32 to vector<2x32xf32>
    %22 = arith.subf %21, %12 : vector<2x32xf32>
    %23 = arith.mulf %20, %22 : vector<2x32xf32>
    %24 = math.tanh %23 : vector<2x32xf32>
    %25 = arith.mulf %18, %24 : vector<2x32xf32>
    %c0_8 = arith.constant 0 : index
    %c0_9 = arith.constant 0 : index
    %c0_10 = arith.constant 0 : index
    %26 = vector.load %arg5[%c0_8, %c0_9, %c0_10] : memref<8x2x32xf32, #tpu.memory_space<vmem>>, vector<1x2x32xf32>
    %27 = vector.shape_cast %26 : vector<1x2x32xf32> to vector<2x32xf32>
    %28 = vector.shape_cast %25 : vector<2x32xf32> to vector<1x2x32xf32>
    tpu.vector_store %arg5[%c0_8, %c0_9, %c0_10], %28 {strides = array<i32>} : memref<8x2x32xf32, #tpu.memory_space<vmem>>, vector<1x2x32xf32>,
    %c0_11 = arith.constant 0 : index
    %c0_12 = arith.constant 0 : index
    %c0_13 = arith.constant 0 : index
    %29 = vector.load %arg6[%c0_11, %c0_12, %c0_13] : memref<8x2x32xf32, #tpu.memory_space<vmem>>, vector<1x2x32xf32>
    %30 = vector.shape_cast %29 : vector<1x2x32xf32> to vector<2x32xf32>
    %31 = vector.shape_cast %23 : vector<2x32xf32> to vector<1x2x32xf32>
    tpu.vector_store %arg6[%c0_11, %c0_12, %c0_13], %31 {strides = array<i32>} : memref<8x2x32xf32, #tpu.memory_space<vmem>>, vector<1x2x32xf32>,
    %c0_14 = arith.constant 0 : index
    %c1 = arith.constant 1 : index
    %32 = memref.load %arg0[%c0_14, %c1] : memref<2x8xi32, #tpu.memory_space<smem>>
    %33 = arith.index_cast %32 : i32 to index
    %c0_15 = arith.constant 0 : index
    %c0_16 = arith.constant 0 : index
    %34 = vector.load %arg5[%33, %c0_15, %c0_16] : memref<8x2x32xf32, #tpu.memory_space<vmem>>, vector<1x2x32xf32>
    %35 = vector.shape_cast %34 : vector<1x2x32xf32> to vector<2x32xf32>
    %36 = vector.extract_strided_slice %35 {offsets = [0, 0], sizes = [1, 32], strides = [1, 1]} : vector<2x32xf32> to vector<1x32xf32>
    %37 = arith.index_cast %32 : i32 to index
    %c0_17 = arith.constant 0 : index
    %c0_18 = arith.constant 0 : index
    %38 = vector.load %arg6[%37, %c0_17, %c0_18] : memref<8x2x32xf32, #tpu.memory_space<vmem>>, vector<1x2x32xf32>
    %39 = vector.shape_cast %38 : vector<1x2x32xf32> to vector<2x32xf32>
    %40 = vector.extract_strided_slice %39 {offsets = [0, 0], sizes = [1, 32], strides = [1, 1]} : vector<2x32xf32> to vector<1x32xf32>
    %c1_19 = arith.constant 1 : index
    %c1_20 = arith.constant 1 : index
    %41 = memref.load %arg0[%c1_19, %c1_20] : memref<2x8xi32, #tpu.memory_space<smem>>
    %42 = arith.index_cast %41 : i32 to index
    %c0_21 = arith.constant 0 : index
    %c0_22 = arith.constant 0 : index
    %43 = vector.load %arg5[%42, %c0_21, %c0_22] : memref<8x2x32xf32, #tpu.memory_space<vmem>>, vector<1x2x32xf32>
    %44 = vector.shape_cast %43 : vector<1x2x32xf32> to vector<2x32xf32>
    %45 = vector.extract_strided_slice %44 {offsets = [1, 0], sizes = [1, 32], strides = [1, 1]} : vector<2x32xf32> to vector<1x32xf32>
    %46 = arith.index_cast %41 : i32 to index
    %c0_23 = arith.constant 0 : index
    %c0_24 = arith.constant 0 : index
    %47 = vector.load %arg6[%46, %c0_23, %c0_24] : memref<8x2x32xf32, #tpu.memory_space<vmem>>, vector<1x2x32xf32>
    %48 = vector.shape_cast %47 : vector<1x2x32xf32> to vector<2x32xf32>
    %49 = vector.extract_strided_slice %48 {offsets = [1, 0], sizes = [1, 32], strides = [1, 1]} : vector<2x32xf32> to vector<1x32xf32>
    %50 = tpu.concatenate %36, %45 in 0 : vector<1x32xf32>, vector<1x32xf32> -> vector<2x32xf32>
    %51 = tpu.concatenate %40, %49 in 0 : vector<1x32xf32>, vector<1x32xf32> -> vector<2x32xf32>
    %52 = arith.truncf %50 : vector<2x32xf32> to vector<2x32xbf16>
    %c0_25 = arith.constant 0 : index
    %c0_26 = arith.constant 0 : index
    %53 = vector.load %arg4[%c0_25, %c0_26] : memref<32x96xbf16, #tpu.memory_space<vmem>>, vector<32x96xbf16>
    %cst_27 = arith.constant dense<0.000000e+00> : vector<2x96xf32>
    %54 = tpu.matmul %52, %53, %cst_27 {dimension_numbers = #tpu.dot_dimension_numbers<[1], [0], [0], [1], [0, 0, 1, 1], [], []>} : vector<2x32xbf16>, vector<32x96xbf16>, vector<2x96xf32> -> vector<2x96xf32>
    %55 = vector.extract_strided_slice %5 {offsets = [2, 0], sizes = [2, 96], strides = [1, 1]} : vector<16x96xf32> to vector<2x96xf32>
    %56 = arith.addf %54, %55 : vector<2x96xf32>
    %57 = vector.extract_strided_slice %56 {offsets = [0, 0], sizes = [2, 32], strides = [1, 1]} : vector<2x96xf32> to vector<2x32xf32>
    %58 = arith.negf %57 : vector<2x32xf32>
    %59 = math.exp %58 : vector<2x32xf32>
    %cst_28 = arith.constant 1.000000e+00 : f32
    %60 = vector.broadcast %cst_28 : f32 to vector<2x32xf32>
    %61 = arith.addf %60, %59 : vector<2x32xf32>
    %62 = arith.divf %60, %61 : vector<2x32xf32>
    %63 = vector.extract_strided_slice %56 {offsets = [0, 32], sizes = [2, 32], strides = [1, 1]} : vector<2x96xf32> to vector<2x32xf32>
    %64 = arith.negf %63 : vector<2x32xf32>
    %65 = math.exp %64 : vector<2x32xf32>
    %cst_29 = arith.constant 1.000000e+00 : f32
    %66 = vector.broadcast %cst_29 : f32 to vector<2x32xf32>
    %67 = arith.addf %66, %65 : vector<2x32xf32>
    %68 = arith.divf %66, %67 : vector<2x32xf32>
    %69 = vector.extract_strided_slice %56 {offsets = [0, 64], sizes = [2, 32], strides = [1, 1]} : vector<2x96xf32> to vector<2x32xf32>
    %70 = math.tanh %69 : vector<2x32xf32>
    %71 = arith.mulf %51, %62 : vector<2x32xf32>
    %cst_30 = arith.constant 1.000000e+00 : f32
    %72 = vector.broadcast %cst_30 : f32 to vector<2x32xf32>
    %73 = arith.subf %72, %62 : vector<2x32xf32>
    %74 = arith.mulf %70, %73 : vector<2x32xf32>
    %75 = arith.addf %71, %74 : vector<2x32xf32>
    %76 = math.tanh %75 : vector<2x32xf32>
    %77 = arith.mulf %68, %76 : vector<2x32xf32>
    %c1_31 = arith.constant 1 : index
    %c0_32 = arith.constant 0 : index
    %c0_33 = arith.constant 0 : index
    %78 = vector.load %arg5[%c1_31, %c0_32, %c0_33] : memref<8x2x32xf32, #tpu.memory_space<vmem>>, vector<1x2x32xf32>
    %79 = vector.shape_cast %78 : vector<1x2x32xf32> to vector<2x32xf32>
    %80 = vector.shape_cast %77 : vector<2x32xf32> to vector<1x2x32xf32>
    tpu.vector_store %arg5[%c1_31, %c0_32, %c0_33], %80 {strides = array<i32>} : memref<8x2x32xf32, #tpu.memory_space<vmem>>, vector<1x2x32xf32>,
    %c1_34 = arith.constant 1 : index
    %c0_35 = arith.constant 0 : index
    %c0_36 = arith.constant 0 : index
    %81 = vector.load %arg6[%c1_34, %c0_35, %c0_36] : memref<8x2x32xf32, #tpu.memory_space<vmem>>, vector<1x2x32xf32>
    %82 = vector.shape_cast %81 : vector<1x2x32xf32> to vector<2x32xf32>
    %83 = vector.shape_cast %75 : vector<2x32xf32> to vector<1x2x32xf32>
    tpu.vector_store %arg6[%c1_34, %c0_35, %c0_36], %83 {strides = array<i32>} : memref<8x2x32xf32, #tpu.memory_space<vmem>>, vector<1x2x32xf32>,
    %c0_37 = arith.constant 0 : index
    %c2 = arith.constant 2 : index
    %84 = memref.load %arg0[%c0_37, %c2] : memref<2x8xi32, #tpu.memory_space<smem>>
    %85 = arith.index_cast %84 : i32 to index
    %c0_38 = arith.constant 0 : index
    %c0_39 = arith.constant 0 : index
    %86 = vector.load %arg5[%85, %c0_38, %c0_39] : memref<8x2x32xf32, #tpu.memory_space<vmem>>, vector<1x2x32xf32>
    %87 = vector.shape_cast %86 : vector<1x2x32xf32> to vector<2x32xf32>
    %88 = vector.extract_strided_slice %87 {offsets = [0, 0], sizes = [1, 32], strides = [1, 1]} : vector<2x32xf32> to vector<1x32xf32>
    %89 = arith.index_cast %84 : i32 to index
    %c0_40 = arith.constant 0 : index
    %c0_41 = arith.constant 0 : index
    %90 = vector.load %arg6[%89, %c0_40, %c0_41] : memref<8x2x32xf32, #tpu.memory_space<vmem>>, vector<1x2x32xf32>
    %91 = vector.shape_cast %90 : vector<1x2x32xf32> to vector<2x32xf32>
    %92 = vector.extract_strided_slice %91 {offsets = [0, 0], sizes = [1, 32], strides = [1, 1]} : vector<2x32xf32> to vector<1x32xf32>
    %c1_42 = arith.constant 1 : index
    %c2_43 = arith.constant 2 : index
    %93 = memref.load %arg0[%c1_42, %c2_43] : memref<2x8xi32, #tpu.memory_space<smem>>
    %94 = arith.index_cast %93 : i32 to index
    %c0_44 = arith.constant 0 : index
    %c0_45 = arith.constant 0 : index
    %95 = vector.load %arg5[%94, %c0_44, %c0_45] : memref<8x2x32xf32, #tpu.memory_space<vmem>>, vector<1x2x32xf32>
    %96 = vector.shape_cast %95 : vector<1x2x32xf32> to vector<2x32xf32>
    %97 = vector.extract_strided_slice %96 {offsets = [1, 0], sizes = [1, 32], strides = [1, 1]} : vector<2x32xf32> to vector<1x32xf32>
    %98 = arith.index_cast %93 : i32 to index
    %c0_46 = arith.constant 0 : index
    %c0_47 = arith.constant 0 : index
    %99 = vector.load %arg6[%98, %c0_46, %c0_47] : memref<8x2x32xf32, #tpu.memory_space<vmem>>, vector<1x2x32xf32>
    %100 = vector.shape_cast %99 : vector<1x2x32xf32> to vector<2x32xf32>
    %101 = vector.extract_strided_slice %100 {offsets = [1, 0], sizes = [1, 32], strides = [1, 1]} : vector<2x32xf32> to vector<1x32xf32>
    %102 = tpu.concatenate %88, %97 in 0 : vector<1x32xf32>, vector<1x32xf32> -> vector<2x32xf32>
    %103 = tpu.concatenate %92, %101 in 0 : vector<1x32xf32>, vector<1x32xf32> -> vector<2x32xf32>
    %104 = arith.truncf %102 : vector<2x32xf32> to vector<2x32xbf16>
    %c0_48 = arith.constant 0 : index
    %c0_49 = arith.constant 0 : index
    %105 = vector.load %arg4[%c0_48, %c0_49] : memref<32x96xbf16, #tpu.memory_space<vmem>>, vector<32x96xbf16>
    %cst_50 = arith.constant dense<0.000000e+00> : vector<2x96xf32>
    %106 = tpu.matmul %104, %105, %cst_50 {dimension_numbers = #tpu.dot_dimension_numbers<[1], [0], [0], [1], [0, 0, 1, 1], [], []>} : vector<2x32xbf16>, vector<32x96xbf16>, vector<2x96xf32> -> vector<2x96xf32>
    %107 = vector.extract_strided_slice %5 {offsets = [4, 0], sizes = [2, 96], strides = [1, 1]} : vector<16x96xf32> to vector<2x96xf32>
    %108 = arith.addf %106, %107 : vector<2x96xf32>
    %109 = vector.extract_strided_slice %108 {offsets = [0, 0], sizes = [2, 32], strides = [1, 1]} : vector<2x96xf32> to vector<2x32xf32>
    %110 = arith.negf %109 : vector<2x32xf32>
    %111 = math.exp %110 : vector<2x32xf32>
    %cst_51 = arith.constant 1.000000e+00 : f32
    %112 = vector.broadcast %cst_51 : f32 to vector<2x32xf32>
    %113 = arith.addf %112, %111 : vector<2x32xf32>
    %114 = arith.divf %112, %113 : vector<2x32xf32>
    %115 = vector.extract_strided_slice %108 {offsets = [0, 32], sizes = [2, 32], strides = [1, 1]} : vector<2x96xf32> to vector<2x32xf32>
    %116 = arith.negf %115 : vector<2x32xf32>
    %117 = math.exp %116 : vector<2x32xf32>
    %cst_52 = arith.constant 1.000000e+00 : f32
    %118 = vector.broadcast %cst_52 : f32 to vector<2x32xf32>
    %119 = arith.addf %118, %117 : vector<2x32xf32>
    %120 = arith.divf %118, %119 : vector<2x32xf32>
    %121 = vector.extract_strided_slice %108 {offsets = [0, 64], sizes = [2, 32], strides = [1, 1]} : vector<2x96xf32> to vector<2x32xf32>
    %122 = math.tanh %121 : vector<2x32xf32>
    %123 = arith.mulf %103, %114 : vector<2x32xf32>
    %cst_53 = arith.constant 1.000000e+00 : f32
    %124 = vector.broadcast %cst_53 : f32 to vector<2x32xf32>
    %125 = arith.subf %124, %114 : vector<2x32xf32>
    %126 = arith.mulf %122, %125 : vector<2x32xf32>
    %127 = arith.addf %123, %126 : vector<2x32xf32>
    %128 = math.tanh %127 : vector<2x32xf32>
    %129 = arith.mulf %120, %128 : vector<2x32xf32>
    %c2_54 = arith.constant 2 : index
    %c0_55 = arith.constant 0 : index
    %c0_56 = arith.constant 0 : index
    %130 = vector.load %arg5[%c2_54, %c0_55, %c0_56] : memref<8x2x32xf32, #tpu.memory_space<vmem>>, vector<1x2x32xf32>
    %131 = vector.shape_cast %130 : vector<1x2x32xf32> to vector<2x32xf32>
    %132 = vector.shape_cast %129 : vector<2x32xf32> to vector<1x2x32xf32>
    tpu.vector_store %arg5[%c2_54, %c0_55, %c0_56], %132 {strides = array<i32>} : memref<8x2x32xf32, #tpu.memory_space<vmem>>, vector<1x2x32xf32>,
    %c2_57 = arith.constant 2 : index
    %c0_58 = arith.constant 0 : index
    %c0_59 = arith.constant 0 : index
    %133 = vector.load %arg6[%c2_57, %c0_58, %c0_59] : memref<8x2x32xf32, #tpu.memory_space<vmem>>, vector<1x2x32xf32>
    %134 = vector.shape_cast %133 : vector<1x2x32xf32> to vector<2x32xf32>
    %135 = vector.shape_cast %127 : vector<2x32xf32> to vector<1x2x32xf32>
    tpu.vector_store %arg6[%c2_57, %c0_58, %c0_59], %135 {strides = array<i32>} : memref<8x2x32xf32, #tpu.memory_space<vmem>>, vector<1x2x32xf32>,
    %c0_60 = arith.constant 0 : index
    %c3 = arith.constant 3 : index
    %136 = memref.load %arg0[%c0_60, %c3] : memref<2x8xi32, #tpu.memory_space<smem>>
    %137 = arith.index_cast %136 : i32 to index
    %c0_61 = arith.constant 0 : index
    %c0_62 = arith.constant 0 : index
    %138 = vector.load %arg5[%137, %c0_61, %c0_62] : memref<8x2x32xf32, #tpu.memory_space<vmem>>, vector<1x2x32xf32>
    %139 = vector.shape_cast %138 : vector<1x2x32xf32> to vector<2x32xf32>
    %140 = vector.extract_strided_slice %139 {offsets = [0, 0], sizes = [1, 32], strides = [1, 1]} : vector<2x32xf32> to vector<1x32xf32>
    %141 = arith.index_cast %136 : i32 to index
    %c0_63 = arith.constant 0 : index
    %c0_64 = arith.constant 0 : index
    %142 = vector.load %arg6[%141, %c0_63, %c0_64] : memref<8x2x32xf32, #tpu.memory_space<vmem>>, vector<1x2x32xf32>
    %143 = vector.shape_cast %142 : vector<1x2x32xf32> to vector<2x32xf32>
    %144 = vector.extract_strided_slice %143 {offsets = [0, 0], sizes = [1, 32], strides = [1, 1]} : vector<2x32xf32> to vector<1x32xf32>
    %c1_65 = arith.constant 1 : index
    %c3_66 = arith.constant 3 : index
    %145 = memref.load %arg0[%c1_65, %c3_66] : memref<2x8xi32, #tpu.memory_space<smem>>
    %146 = arith.index_cast %145 : i32 to index
    %c0_67 = arith.constant 0 : index
    %c0_68 = arith.constant 0 : index
    %147 = vector.load %arg5[%146, %c0_67, %c0_68] : memref<8x2x32xf32, #tpu.memory_space<vmem>>, vector<1x2x32xf32>
    %148 = vector.shape_cast %147 : vector<1x2x32xf32> to vector<2x32xf32>
    %149 = vector.extract_strided_slice %148 {offsets = [1, 0], sizes = [1, 32], strides = [1, 1]} : vector<2x32xf32> to vector<1x32xf32>
    %150 = arith.index_cast %145 : i32 to index
    %c0_69 = arith.constant 0 : index
    %c0_70 = arith.constant 0 : index
    %151 = vector.load %arg6[%150, %c0_69, %c0_70] : memref<8x2x32xf32, #tpu.memory_space<vmem>>, vector<1x2x32xf32>
    %152 = vector.shape_cast %151 : vector<1x2x32xf32> to vector<2x32xf32>
    %153 = vector.extract_strided_slice %152 {offsets = [1, 0], sizes = [1, 32], strides = [1, 1]} : vector<2x32xf32> to vector<1x32xf32>
    %154 = tpu.concatenate %140, %149 in 0 : vector<1x32xf32>, vector<1x32xf32> -> vector<2x32xf32>
    %155 = tpu.concatenate %144, %153 in 0 : vector<1x32xf32>, vector<1x32xf32> -> vector<2x32xf32>
    %156 = arith.truncf %154 : vector<2x32xf32> to vector<2x32xbf16>
    %c0_71 = arith.constant 0 : index
    %c0_72 = arith.constant 0 : index
    %157 = vector.load %arg4[%c0_71, %c0_72] : memref<32x96xbf16, #tpu.memory_space<vmem>>, vector<32x96xbf16>
    %cst_73 = arith.constant dense<0.000000e+00> : vector<2x96xf32>
    %158 = tpu.matmul %156, %157, %cst_73 {dimension_numbers = #tpu.dot_dimension_numbers<[1], [0], [0], [1], [0, 0, 1, 1], [], []>} : vector<2x32xbf16>, vector<32x96xbf16>, vector<2x96xf32> -> vector<2x96xf32>
    %159 = vector.extract_strided_slice %5 {offsets = [6, 0], sizes = [2, 96], strides = [1, 1]} : vector<16x96xf32> to vector<2x96xf32>
    %160 = arith.addf %158, %159 : vector<2x96xf32>
    %161 = vector.extract_strided_slice %160 {offsets = [0, 0], sizes = [2, 32], strides = [1, 1]} : vector<2x96xf32> to vector<2x32xf32>
    %162 = arith.negf %161 : vector<2x32xf32>
    %163 = math.exp %162 : vector<2x32xf32>
    %cst_74 = arith.constant 1.000000e+00 : f32
    %164 = vector.broadcast %cst_74 : f32 to vector<2x32xf32>
    %165 = arith.addf %164, %163 : vector<2x32xf32>
    %166 = arith.divf %164, %165 : vector<2x32xf32>
    %167 = vector.extract_strided_slice %160 {offsets = [0, 32], sizes = [2, 32], strides = [1, 1]} : vector<2x96xf32> to vector<2x32xf32>
    %168 = arith.negf %167 : vector<2x32xf32>
    %169 = math.exp %168 : vector<2x32xf32>
    %cst_75 = arith.constant 1.000000e+00 : f32
    %170 = vector.broadcast %cst_75 : f32 to vector<2x32xf32>
    %171 = arith.addf %170, %169 : vector<2x32xf32>
    %172 = arith.divf %170, %171 : vector<2x32xf32>
    %173 = vector.extract_strided_slice %160 {offsets = [0, 64], sizes = [2, 32], strides = [1, 1]} : vector<2x96xf32> to vector<2x32xf32>
    %174 = math.tanh %173 : vector<2x32xf32>
    %175 = arith.mulf %155, %166 : vector<2x32xf32>
    %cst_76 = arith.constant 1.000000e+00 : f32
    %176 = vector.broadcast %cst_76 : f32 to vector<2x32xf32>
    %177 = arith.subf %176, %166 : vector<2x32xf32>
    %178 = arith.mulf %174, %177 : vector<2x32xf32>
    %179 = arith.addf %175, %178 : vector<2x32xf32>
    %180 = math.tanh %179 : vector<2x32xf32>
    %181 = arith.mulf %172, %180 : vector<2x32xf32>
    %c3_77 = arith.constant 3 : index
    %c0_78 = arith.constant 0 : index
    %c0_79 = arith.constant 0 : index
    %182 = vector.load %arg5[%c3_77, %c0_78, %c0_79] : memref<8x2x32xf32, #tpu.memory_space<vmem>>, vector<1x2x32xf32>
    %183 = vector.shape_cast %182 : vector<1x2x32xf32> to vector<2x32xf32>
    %184 = vector.shape_cast %181 : vector<2x32xf32> to vector<1x2x32xf32>
    tpu.vector_store %arg5[%c3_77, %c0_78, %c0_79], %184 {strides = array<i32>} : memref<8x2x32xf32, #tpu.memory_space<vmem>>, vector<1x2x32xf32>,
    %c3_80 = arith.constant 3 : index
    %c0_81 = arith.constant 0 : index
    %c0_82 = arith.constant 0 : index
    %185 = vector.load %arg6[%c3_80, %c0_81, %c0_82] : memref<8x2x32xf32, #tpu.memory_space<vmem>>, vector<1x2x32xf32>
    %186 = vector.shape_cast %185 : vector<1x2x32xf32> to vector<2x32xf32>
    %187 = vector.shape_cast %179 : vector<2x32xf32> to vector<1x2x32xf32>
    tpu.vector_store %arg6[%c3_80, %c0_81, %c0_82], %187 {strides = array<i32>} : memref<8x2x32xf32, #tpu.memory_space<vmem>>, vector<1x2x32xf32>,
    %c0_83 = arith.constant 0 : index
    %c4 = arith.constant 4 : index
    %188 = memref.load %arg0[%c0_83, %c4] : memref<2x8xi32, #tpu.memory_space<smem>>
    %189 = arith.index_cast %188 : i32 to index
    %c0_84 = arith.constant 0 : index
    %c0_85 = arith.constant 0 : index
    %190 = vector.load %arg5[%189, %c0_84, %c0_85] : memref<8x2x32xf32, #tpu.memory_space<vmem>>, vector<1x2x32xf32>
    %191 = vector.shape_cast %190 : vector<1x2x32xf32> to vector<2x32xf32>
    %192 = vector.extract_strided_slice %191 {offsets = [0, 0], sizes = [1, 32], strides = [1, 1]} : vector<2x32xf32> to vector<1x32xf32>
    %193 = arith.index_cast %188 : i32 to index
    %c0_86 = arith.constant 0 : index
    %c0_87 = arith.constant 0 : index
    %194 = vector.load %arg6[%193, %c0_86, %c0_87] : memref<8x2x32xf32, #tpu.memory_space<vmem>>, vector<1x2x32xf32>
    %195 = vector.shape_cast %194 : vector<1x2x32xf32> to vector<2x32xf32>
    %196 = vector.extract_strided_slice %195 {offsets = [0, 0], sizes = [1, 32], strides = [1, 1]} : vector<2x32xf32> to vector<1x32xf32>
    %c1_88 = arith.constant 1 : index
    %c4_89 = arith.constant 4 : index
    %197 = memref.load %arg0[%c1_88, %c4_89] : memref<2x8xi32, #tpu.memory_space<smem>>
    %198 = arith.index_cast %197 : i32 to index
    %c0_90 = arith.constant 0 : index
    %c0_91 = arith.constant 0 : index
    %199 = vector.load %arg5[%198, %c0_90, %c0_91] : memref<8x2x32xf32, #tpu.memory_space<vmem>>, vector<1x2x32xf32>
    %200 = vector.shape_cast %199 : vector<1x2x32xf32> to vector<2x32xf32>
    %201 = vector.extract_strided_slice %200 {offsets = [1, 0], sizes = [1, 32], strides = [1, 1]} : vector<2x32xf32> to vector<1x32xf32>
    %202 = arith.index_cast %197 : i32 to index
    %c0_92 = arith.constant 0 : index
    %c0_93 = arith.constant 0 : index
    %203 = vector.load %arg6[%202, %c0_92, %c0_93] : memref<8x2x32xf32, #tpu.memory_space<vmem>>, vector<1x2x32xf32>
    %204 = vector.shape_cast %203 : vector<1x2x32xf32> to vector<2x32xf32>
    %205 = vector.extract_strided_slice %204 {offsets = [1, 0], sizes = [1, 32], strides = [1, 1]} : vector<2x32xf32> to vector<1x32xf32>
    %206 = tpu.concatenate %192, %201 in 0 : vector<1x32xf32>, vector<1x32xf32> -> vector<2x32xf32>
    %207 = tpu.concatenate %196, %205 in 0 : vector<1x32xf32>, vector<1x32xf32> -> vector<2x32xf32>
    %208 = arith.truncf %206 : vector<2x32xf32> to vector<2x32xbf16>
    %c0_94 = arith.constant 0 : index
    %c0_95 = arith.constant 0 : index
    %209 = vector.load %arg4[%c0_94, %c0_95] : memref<32x96xbf16, #tpu.memory_space<vmem>>, vector<32x96xbf16>
    %cst_96 = arith.constant dense<0.000000e+00> : vector<2x96xf32>
    %210 = tpu.matmul %208, %209, %cst_96 {dimension_numbers = #tpu.dot_dimension_numbers<[1], [0], [0], [1], [0, 0, 1, 1], [], []>} : vector<2x32xbf16>, vector<32x96xbf16>, vector<2x96xf32> -> vector<2x96xf32>
    %211 = vector.extract_strided_slice %5 {offsets = [8, 0], sizes = [2, 96], strides = [1, 1]} : vector<16x96xf32> to vector<2x96xf32>
    %212 = arith.addf %210, %211 : vector<2x96xf32>
    %213 = vector.extract_strided_slice %212 {offsets = [0, 0], sizes = [2, 32], strides = [1, 1]} : vector<2x96xf32> to vector<2x32xf32>
    %214 = arith.negf %213 : vector<2x32xf32>
    %215 = math.exp %214 : vector<2x32xf32>
    %cst_97 = arith.constant 1.000000e+00 : f32
    %216 = vector.broadcast %cst_97 : f32 to vector<2x32xf32>
    %217 = arith.addf %216, %215 : vector<2x32xf32>
    %218 = arith.divf %216, %217 : vector<2x32xf32>
    %219 = vector.extract_strided_slice %212 {offsets = [0, 32], sizes = [2, 32], strides = [1, 1]} : vector<2x96xf32> to vector<2x32xf32>
    %220 = arith.negf %219 : vector<2x32xf32>
    %221 = math.exp %220 : vector<2x32xf32>
    %cst_98 = arith.constant 1.000000e+00 : f32
    %222 = vector.broadcast %cst_98 : f32 to vector<2x32xf32>
    %223 = arith.addf %222, %221 : vector<2x32xf32>
    %224 = arith.divf %222, %223 : vector<2x32xf32>
    %225 = vector.extract_strided_slice %212 {offsets = [0, 64], sizes = [2, 32], strides = [1, 1]} : vector<2x96xf32> to vector<2x32xf32>
    %226 = math.tanh %225 : vector<2x32xf32>
    %227 = arith.mulf %207, %218 : vector<2x32xf32>
    %cst_99 = arith.constant 1.000000e+00 : f32
    %228 = vector.broadcast %cst_99 : f32 to vector<2x32xf32>
    %229 = arith.subf %228, %218 : vector<2x32xf32>
    %230 = arith.mulf %226, %229 : vector<2x32xf32>
    %231 = arith.addf %227, %230 : vector<2x32xf32>
    %232 = math.tanh %231 : vector<2x32xf32>
    %233 = arith.mulf %224, %232 : vector<2x32xf32>
    %c4_100 = arith.constant 4 : index
    %c0_101 = arith.constant 0 : index
    %c0_102 = arith.constant 0 : index
    %234 = vector.load %arg5[%c4_100, %c0_101, %c0_102] : memref<8x2x32xf32, #tpu.memory_space<vmem>>, vector<1x2x32xf32>
    %235 = vector.shape_cast %234 : vector<1x2x32xf32> to vector<2x32xf32>
    %236 = vector.shape_cast %233 : vector<2x32xf32> to vector<1x2x32xf32>
    tpu.vector_store %arg5[%c4_100, %c0_101, %c0_102], %236 {strides = array<i32>} : memref<8x2x32xf32, #tpu.memory_space<vmem>>, vector<1x2x32xf32>,
    %c4_103 = arith.constant 4 : index
    %c0_104 = arith.constant 0 : index
    %c0_105 = arith.constant 0 : index
    %237 = vector.load %arg6[%c4_103, %c0_104, %c0_105] : memref<8x2x32xf32, #tpu.memory_space<vmem>>, vector<1x2x32xf32>
    %238 = vector.shape_cast %237 : vector<1x2x32xf32> to vector<2x32xf32>
    %239 = vector.shape_cast %231 : vector<2x32xf32> to vector<1x2x32xf32>
    tpu.vector_store %arg6[%c4_103, %c0_104, %c0_105], %239 {strides = array<i32>} : memref<8x2x32xf32, #tpu.memory_space<vmem>>, vector<1x2x32xf32>,
    %c0_106 = arith.constant 0 : index
    %c5 = arith.constant 5 : index
    %240 = memref.load %arg0[%c0_106, %c5] : memref<2x8xi32, #tpu.memory_space<smem>>
    %241 = arith.index_cast %240 : i32 to index
    %c0_107 = arith.constant 0 : index
    %c0_108 = arith.constant 0 : index
    %242 = vector.load %arg5[%241, %c0_107, %c0_108] : memref<8x2x32xf32, #tpu.memory_space<vmem>>, vector<1x2x32xf32>
    %243 = vector.shape_cast %242 : vector<1x2x32xf32> to vector<2x32xf32>
    %244 = vector.extract_strided_slice %243 {offsets = [0, 0], sizes = [1, 32], strides = [1, 1]} : vector<2x32xf32> to vector<1x32xf32>
    %245 = arith.index_cast %240 : i32 to index
    %c0_109 = arith.constant 0 : index
    %c0_110 = arith.constant 0 : index
    %246 = vector.load %arg6[%245, %c0_109, %c0_110] : memref<8x2x32xf32, #tpu.memory_space<vmem>>, vector<1x2x32xf32>
    %247 = vector.shape_cast %246 : vector<1x2x32xf32> to vector<2x32xf32>
    %248 = vector.extract_strided_slice %247 {offsets = [0, 0], sizes = [1, 32], strides = [1, 1]} : vector<2x32xf32> to vector<1x32xf32>
    %c1_111 = arith.constant 1 : index
    %c5_112 = arith.constant 5 : index
    %249 = memref.load %arg0[%c1_111, %c5_112] : memref<2x8xi32, #tpu.memory_space<smem>>
    %250 = arith.index_cast %249 : i32 to index
    %c0_113 = arith.constant 0 : index
    %c0_114 = arith.constant 0 : index
    %251 = vector.load %arg5[%250, %c0_113, %c0_114] : memref<8x2x32xf32, #tpu.memory_space<vmem>>, vector<1x2x32xf32>
    %252 = vector.shape_cast %251 : vector<1x2x32xf32> to vector<2x32xf32>
    %253 = vector.extract_strided_slice %252 {offsets = [1, 0], sizes = [1, 32], strides = [1, 1]} : vector<2x32xf32> to vector<1x32xf32>
    %254 = arith.index_cast %249 : i32 to index
    %c0_115 = arith.constant 0 : index
    %c0_116 = arith.constant 0 : index
    %255 = vector.load %arg6[%254, %c0_115, %c0_116] : memref<8x2x32xf32, #tpu.memory_space<vmem>>, vector<1x2x32xf32>
    %256 = vector.shape_cast %255 : vector<1x2x32xf32> to vector<2x32xf32>
    %257 = vector.extract_strided_slice %256 {offsets = [1, 0], sizes = [1, 32], strides = [1, 1]} : vector<2x32xf32> to vector<1x32xf32>
    %258 = tpu.concatenate %244, %253 in 0 : vector<1x32xf32>, vector<1x32xf32> -> vector<2x32xf32>
    %259 = tpu.concatenate %248, %257 in 0 : vector<1x32xf32>, vector<1x32xf32> -> vector<2x32xf32>
    %260 = arith.truncf %258 : vector<2x32xf32> to vector<2x32xbf16>
    %c0_117 = arith.constant 0 : index
    %c0_118 = arith.constant 0 : index
    %261 = vector.load %arg4[%c0_117, %c0_118] : memref<32x96xbf16, #tpu.memory_space<vmem>>, vector<32x96xbf16>
    %cst_119 = arith.constant dense<0.000000e+00> : vector<2x96xf32>
    %262 = tpu.matmul %260, %261, %cst_119 {dimension_numbers = #tpu.dot_dimension_numbers<[1], [0], [0], [1], [0, 0, 1, 1], [], []>} : vector<2x32xbf16>, vector<32x96xbf16>, vector<2x96xf32> -> vector<2x96xf32>
    %263 = vector.extract_strided_slice %5 {offsets = [10, 0], sizes = [2, 96], strides = [1, 1]} : vector<16x96xf32> to vector<2x96xf32>
    %264 = arith.addf %262, %263 : vector<2x96xf32>
    %265 = vector.extract_strided_slice %264 {offsets = [0, 0], sizes = [2, 32], strides = [1, 1]} : vector<2x96xf32> to vector<2x32xf32>
    %266 = arith.negf %265 : vector<2x32xf32>
    %267 = math.exp %266 : vector<2x32xf32>
    %cst_120 = arith.constant 1.000000e+00 : f32
    %268 = vector.broadcast %cst_120 : f32 to vector<2x32xf32>
    %269 = arith.addf %268, %267 : vector<2x32xf32>
    %270 = arith.divf %268, %269 : vector<2x32xf32>
    %271 = vector.extract_strided_slice %264 {offsets = [0, 32], sizes = [2, 32], strides = [1, 1]} : vector<2x96xf32> to vector<2x32xf32>
    %272 = arith.negf %271 : vector<2x32xf32>
    %273 = math.exp %272 : vector<2x32xf32>
    %cst_121 = arith.constant 1.000000e+00 : f32
    %274 = vector.broadcast %cst_121 : f32 to vector<2x32xf32>
    %275 = arith.addf %274, %273 : vector<2x32xf32>
    %276 = arith.divf %274, %275 : vector<2x32xf32>
    %277 = vector.extract_strided_slice %264 {offsets = [0, 64], sizes = [2, 32], strides = [1, 1]} : vector<2x96xf32> to vector<2x32xf32>
    %278 = math.tanh %277 : vector<2x32xf32>
    %279 = arith.mulf %259, %270 : vector<2x32xf32>
    %cst_122 = arith.constant 1.000000e+00 : f32
    %280 = vector.broadcast %cst_122 : f32 to vector<2x32xf32>
    %281 = arith.subf %280, %270 : vector<2x32xf32>
    %282 = arith.mulf %278, %281 : vector<2x32xf32>
    %283 = arith.addf %279, %282 : vector<2x32xf32>
    %284 = math.tanh %283 : vector<2x32xf32>
    %285 = arith.mulf %276, %284 : vector<2x32xf32>
    %c5_123 = arith.constant 5 : index
    %c0_124 = arith.constant 0 : index
    %c0_125 = arith.constant 0 : index
    %286 = vector.load %arg5[%c5_123, %c0_124, %c0_125] : memref<8x2x32xf32, #tpu.memory_space<vmem>>, vector<1x2x32xf32>
    %287 = vector.shape_cast %286 : vector<1x2x32xf32> to vector<2x32xf32>
    %288 = vector.shape_cast %285 : vector<2x32xf32> to vector<1x2x32xf32>
    tpu.vector_store %arg5[%c5_123, %c0_124, %c0_125], %288 {strides = array<i32>} : memref<8x2x32xf32, #tpu.memory_space<vmem>>, vector<1x2x32xf32>,
    %c5_126 = arith.constant 5 : index
    %c0_127 = arith.constant 0 : index
    %c0_128 = arith.constant 0 : index
    %289 = vector.load %arg6[%c5_126, %c0_127, %c0_128] : memref<8x2x32xf32, #tpu.memory_space<vmem>>, vector<1x2x32xf32>
    %290 = vector.shape_cast %289 : vector<1x2x32xf32> to vector<2x32xf32>
    %291 = vector.shape_cast %283 : vector<2x32xf32> to vector<1x2x32xf32>
    tpu.vector_store %arg6[%c5_126, %c0_127, %c0_128], %291 {strides = array<i32>} : memref<8x2x32xf32, #tpu.memory_space<vmem>>, vector<1x2x32xf32>,
    %c0_129 = arith.constant 0 : index
    %c6 = arith.constant 6 : index
    %292 = memref.load %arg0[%c0_129, %c6] : memref<2x8xi32, #tpu.memory_space<smem>>
    %293 = arith.index_cast %292 : i32 to index
    %c0_130 = arith.constant 0 : index
    %c0_131 = arith.constant 0 : index
    %294 = vector.load %arg5[%293, %c0_130, %c0_131] : memref<8x2x32xf32, #tpu.memory_space<vmem>>, vector<1x2x32xf32>
    %295 = vector.shape_cast %294 : vector<1x2x32xf32> to vector<2x32xf32>
    %296 = vector.extract_strided_slice %295 {offsets = [0, 0], sizes = [1, 32], strides = [1, 1]} : vector<2x32xf32> to vector<1x32xf32>
    %297 = arith.index_cast %292 : i32 to index
    %c0_132 = arith.constant 0 : index
    %c0_133 = arith.constant 0 : index
    %298 = vector.load %arg6[%297, %c0_132, %c0_133] : memref<8x2x32xf32, #tpu.memory_space<vmem>>, vector<1x2x32xf32>
    %299 = vector.shape_cast %298 : vector<1x2x32xf32> to vector<2x32xf32>
    %300 = vector.extract_strided_slice %299 {offsets = [0, 0], sizes = [1, 32], strides = [1, 1]} : vector<2x32xf32> to vector<1x32xf32>
    %c1_134 = arith.constant 1 : index
    %c6_135 = arith.constant 6 : index
    %301 = memref.load %arg0[%c1_134, %c6_135] : memref<2x8xi32, #tpu.memory_space<smem>>
    %302 = arith.index_cast %301 : i32 to index
    %c0_136 = arith.constant 0 : index
    %c0_137 = arith.constant 0 : index
    %303 = vector.load %arg5[%302, %c0_136, %c0_137] : memref<8x2x32xf32, #tpu.memory_space<vmem>>, vector<1x2x32xf32>
    %304 = vector.shape_cast %303 : vector<1x2x32xf32> to vector<2x32xf32>
    %305 = vector.extract_strided_slice %304 {offsets = [1, 0], sizes = [1, 32], strides = [1, 1]} : vector<2x32xf32> to vector<1x32xf32>
    %306 = arith.index_cast %301 : i32 to index
    %c0_138 = arith.constant 0 : index
    %c0_139 = arith.constant 0 : index
    %307 = vector.load %arg6[%306, %c0_138, %c0_139] : memref<8x2x32xf32, #tpu.memory_space<vmem>>, vector<1x2x32xf32>
    %308 = vector.shape_cast %307 : vector<1x2x32xf32> to vector<2x32xf32>
    %309 = vector.extract_strided_slice %308 {offsets = [1, 0], sizes = [1, 32], strides = [1, 1]} : vector<2x32xf32> to vector<1x32xf32>
    %310 = tpu.concatenate %296, %305 in 0 : vector<1x32xf32>, vector<1x32xf32> -> vector<2x32xf32>
    %311 = tpu.concatenate %300, %309 in 0 : vector<1x32xf32>, vector<1x32xf32> -> vector<2x32xf32>
    %312 = arith.truncf %310 : vector<2x32xf32> to vector<2x32xbf16>
    %c0_140 = arith.constant 0 : index
    %c0_141 = arith.constant 0 : index
    %313 = vector.load %arg4[%c0_140, %c0_141] : memref<32x96xbf16, #tpu.memory_space<vmem>>, vector<32x96xbf16>
    %cst_142 = arith.constant dense<0.000000e+00> : vector<2x96xf32>
    %314 = tpu.matmul %312, %313, %cst_142 {dimension_numbers = #tpu.dot_dimension_numbers<[1], [0], [0], [1], [0, 0, 1, 1], [], []>} : vector<2x32xbf16>, vector<32x96xbf16>, vector<2x96xf32> -> vector<2x96xf32>
    %315 = vector.extract_strided_slice %5 {offsets = [12, 0], sizes = [2, 96], strides = [1, 1]} : vector<16x96xf32> to vector<2x96xf32>
    %316 = arith.addf %314, %315 : vector<2x96xf32>
    %317 = vector.extract_strided_slice %316 {offsets = [0, 0], sizes = [2, 32], strides = [1, 1]} : vector<2x96xf32> to vector<2x32xf32>
    %318 = arith.negf %317 : vector<2x32xf32>
    %319 = math.exp %318 : vector<2x32xf32>
    %cst_143 = arith.constant 1.000000e+00 : f32
    %320 = vector.broadcast %cst_143 : f32 to vector<2x32xf32>
    %321 = arith.addf %320, %319 : vector<2x32xf32>
    %322 = arith.divf %320, %321 : vector<2x32xf32>
    %323 = vector.extract_strided_slice %316 {offsets = [0, 32], sizes = [2, 32], strides = [1, 1]} : vector<2x96xf32> to vector<2x32xf32>
    %324 = arith.negf %323 : vector<2x32xf32>
    %325 = math.exp %324 : vector<2x32xf32>
    %cst_144 = arith.constant 1.000000e+00 : f32
    %326 = vector.broadcast %cst_144 : f32 to vector<2x32xf32>
    %327 = arith.addf %326, %325 : vector<2x32xf32>
    %328 = arith.divf %326, %327 : vector<2x32xf32>
    %329 = vector.extract_strided_slice %316 {offsets = [0, 64], sizes = [2, 32], strides = [1, 1]} : vector<2x96xf32> to vector<2x32xf32>
    %330 = math.tanh %329 : vector<2x32xf32>
    %331 = arith.mulf %311, %322 : vector<2x32xf32>
    %cst_145 = arith.constant 1.000000e+00 : f32
    %332 = vector.broadcast %cst_145 : f32 to vector<2x32xf32>
    %333 = arith.subf %332, %322 : vector<2x32xf32>
    %334 = arith.mulf %330, %333 : vector<2x32xf32>
    %335 = arith.addf %331, %334 : vector<2x32xf32>
    %336 = math.tanh %335 : vector<2x32xf32>
    %337 = arith.mulf %328, %336 : vector<2x32xf32>
    %c6_146 = arith.constant 6 : index
    %c0_147 = arith.constant 0 : index
    %c0_148 = arith.constant 0 : index
    %338 = vector.load %arg5[%c6_146, %c0_147, %c0_148] : memref<8x2x32xf32, #tpu.memory_space<vmem>>, vector<1x2x32xf32>
    %339 = vector.shape_cast %338 : vector<1x2x32xf32> to vector<2x32xf32>
    %340 = vector.shape_cast %337 : vector<2x32xf32> to vector<1x2x32xf32>
    tpu.vector_store %arg5[%c6_146, %c0_147, %c0_148], %340 {strides = array<i32>} : memref<8x2x32xf32, #tpu.memory_space<vmem>>, vector<1x2x32xf32>,
    %c6_149 = arith.constant 6 : index
    %c0_150 = arith.constant 0 : index
    %c0_151 = arith.constant 0 : index
    %341 = vector.load %arg6[%c6_149, %c0_150, %c0_151] : memref<8x2x32xf32, #tpu.memory_space<vmem>>, vector<1x2x32xf32>
    %342 = vector.shape_cast %341 : vector<1x2x32xf32> to vector<2x32xf32>
    %343 = vector.shape_cast %335 : vector<2x32xf32> to vector<1x2x32xf32>
    tpu.vector_store %arg6[%c6_149, %c0_150, %c0_151], %343 {strides = array<i32>} : memref<8x2x32xf32, #tpu.memory_space<vmem>>, vector<1x2x32xf32>,
    %c0_152 = arith.constant 0 : index
    %c7 = arith.constant 7 : index
    %344 = memref.load %arg0[%c0_152, %c7] : memref<2x8xi32, #tpu.memory_space<smem>>
    %345 = arith.index_cast %344 : i32 to index
    %c0_153 = arith.constant 0 : index
    %c0_154 = arith.constant 0 : index
    %346 = vector.load %arg5[%345, %c0_153, %c0_154] : memref<8x2x32xf32, #tpu.memory_space<vmem>>, vector<1x2x32xf32>
    %347 = vector.shape_cast %346 : vector<1x2x32xf32> to vector<2x32xf32>
    %348 = vector.extract_strided_slice %347 {offsets = [0, 0], sizes = [1, 32], strides = [1, 1]} : vector<2x32xf32> to vector<1x32xf32>
    %349 = arith.index_cast %344 : i32 to index
    %c0_155 = arith.constant 0 : index
    %c0_156 = arith.constant 0 : index
    %350 = vector.load %arg6[%349, %c0_155, %c0_156] : memref<8x2x32xf32, #tpu.memory_space<vmem>>, vector<1x2x32xf32>
    %351 = vector.shape_cast %350 : vector<1x2x32xf32> to vector<2x32xf32>
    %352 = vector.extract_strided_slice %351 {offsets = [0, 0], sizes = [1, 32], strides = [1, 1]} : vector<2x32xf32> to vector<1x32xf32>
    %c1_157 = arith.constant 1 : index
    %c7_158 = arith.constant 7 : index
    %353 = memref.load %arg0[%c1_157, %c7_158] : memref<2x8xi32, #tpu.memory_space<smem>>
    %354 = arith.index_cast %353 : i32 to index
    %c0_159 = arith.constant 0 : index
    %c0_160 = arith.constant 0 : index
    %355 = vector.load %arg5[%354, %c0_159, %c0_160] : memref<8x2x32xf32, #tpu.memory_space<vmem>>, vector<1x2x32xf32>
    %356 = vector.shape_cast %355 : vector<1x2x32xf32> to vector<2x32xf32>
    %357 = vector.extract_strided_slice %356 {offsets = [1, 0], sizes = [1, 32], strides = [1, 1]} : vector<2x32xf32> to vector<1x32xf32>
    %358 = arith.index_cast %353 : i32 to index
    %c0_161 = arith.constant 0 : index
    %c0_162 = arith.constant 0 : index
    %359 = vector.load %arg6[%358, %c0_161, %c0_162] : memref<8x2x32xf32, #tpu.memory_space<vmem>>, vector<1x2x32xf32>
    %360 = vector.shape_cast %359 : vector<1x2x32xf32> to vector<2x32xf32>
    %361 = vector.extract_strided_slice %360 {offsets = [1, 0], sizes = [1, 32], strides = [1, 1]} : vector<2x32xf32> to vector<1x32xf32>
    %362 = tpu.concatenate %348, %357 in 0 : vector<1x32xf32>, vector<1x32xf32> -> vector<2x32xf32>
    %363 = tpu.concatenate %352, %361 in 0 : vector<1x32xf32>, vector<1x32xf32> -> vector<2x32xf32>
    %364 = arith.truncf %362 : vector<2x32xf32> to vector<2x32xbf16>
    %c0_163 = arith.constant 0 : index
    %c0_164 = arith.constant 0 : index
    %365 = vector.load %arg4[%c0_163, %c0_164] : memref<32x96xbf16, #tpu.memory_space<vmem>>, vector<32x96xbf16>
    %cst_165 = arith.constant dense<0.000000e+00> : vector<2x96xf32>
    %366 = tpu.matmul %364, %365, %cst_165 {dimension_numbers = #tpu.dot_dimension_numbers<[1], [0], [0], [1], [0, 0, 1, 1], [], []>} : vector<2x32xbf16>, vector<32x96xbf16>, vector<2x96xf32> -> vector<2x96xf32>
    %367 = vector.extract_strided_slice %5 {offsets = [14, 0], sizes = [2, 96], strides = [1, 1]} : vector<16x96xf32> to vector<2x96xf32>
    %368 = arith.addf %366, %367 : vector<2x96xf32>
    %369 = vector.extract_strided_slice %368 {offsets = [0, 0], sizes = [2, 32], strides = [1, 1]} : vector<2x96xf32> to vector<2x32xf32>
    %370 = arith.negf %369 : vector<2x32xf32>
    %371 = math.exp %370 : vector<2x32xf32>
    %cst_166 = arith.constant 1.000000e+00 : f32
    %372 = vector.broadcast %cst_166 : f32 to vector<2x32xf32>
    %373 = arith.addf %372, %371 : vector<2x32xf32>
    %374 = arith.divf %372, %373 : vector<2x32xf32>
    %375 = vector.extract_strided_slice %368 {offsets = [0, 32], sizes = [2, 32], strides = [1, 1]} : vector<2x96xf32> to vector<2x32xf32>
    %376 = arith.negf %375 : vector<2x32xf32>
    %377 = math.exp %376 : vector<2x32xf32>
    %cst_167 = arith.constant 1.000000e+00 : f32
    %378 = vector.broadcast %cst_167 : f32 to vector<2x32xf32>
    %379 = arith.addf %378, %377 : vector<2x32xf32>
    %380 = arith.divf %378, %379 : vector<2x32xf32>
    %381 = vector.extract_strided_slice %368 {offsets = [0, 64], sizes = [2, 32], strides = [1, 1]} : vector<2x96xf32> to vector<2x32xf32>
    %382 = math.tanh %381 : vector<2x32xf32>
    %383 = arith.mulf %363, %374 : vector<2x32xf32>
    %cst_168 = arith.constant 1.000000e+00 : f32
    %384 = vector.broadcast %cst_168 : f32 to vector<2x32xf32>
    %385 = arith.subf %384, %374 : vector<2x32xf32>
    %386 = arith.mulf %382, %385 : vector<2x32xf32>
    %387 = arith.addf %383, %386 : vector<2x32xf32>
    %388 = math.tanh %387 : vector<2x32xf32>
    %389 = arith.mulf %380, %388 : vector<2x32xf32>
    %c7_169 = arith.constant 7 : index
    %c0_170 = arith.constant 0 : index
    %c0_171 = arith.constant 0 : index
    %390 = vector.load %arg5[%c7_169, %c0_170, %c0_171] : memref<8x2x32xf32, #tpu.memory_space<vmem>>, vector<1x2x32xf32>
    %391 = vector.shape_cast %390 : vector<1x2x32xf32> to vector<2x32xf32>
    %392 = vector.shape_cast %389 : vector<2x32xf32> to vector<1x2x32xf32>
    tpu.vector_store %arg5[%c7_169, %c0_170, %c0_171], %392 {strides = array<i32>} : memref<8x2x32xf32, #tpu.memory_space<vmem>>, vector<1x2x32xf32>,
    %c7_172 = arith.constant 7 : index
    %c0_173 = arith.constant 0 : index
    %c0_174 = arith.constant 0 : index
    %393 = vector.load %arg6[%c7_172, %c0_173, %c0_174] : memref<8x2x32xf32, #tpu.memory_space<vmem>>, vector<1x2x32xf32>
    %394 = vector.shape_cast %393 : vector<1x2x32xf32> to vector<2x32xf32>
    %395 = vector.shape_cast %387 : vector<2x32xf32> to vector<1x2x32xf32>
    tpu.vector_store %arg6[%c7_172, %c0_173, %c0_174], %395 {strides = array<i32>} : memref<8x2x32xf32, #tpu.memory_space<vmem>>, vector<1x2x32xf32>,
    return
  }
}

</mosaic_0001>

<llo_original>
// kernel: tpu_custom_call.1
$region0: #{tpu_custom_call.1}
  #allocation0 [shape = 'u32[]', space=smem, size = 0x4, offset = 0x4, fixed_abs, tag = 'smem constant byte address 0x4 - core index']
  #allocation1 [shape = 'u32[144,128]{1,0:T(1,128)}', space=vmem, size = 0x12000, scoped, tag = 'internal scratch']
  #allocation2 [shape = 'f32[8,2,32]{2,1,0:T(2,128)}', space=vmem, size = 0x2000, scoped, tag = 'scratch operand']
  %s0 = inlined_call_operand.hbm [shape: s32[2,8], index: 0, kind: input, shape index: {}]
  %s1 = inlined_call_operand.hbm [shape: bf16[16,16], index: 1, kind: input, shape index: {}]
  %s2 = inlined_call_operand.hbm [shape: bf16[16,96], index: 2, kind: input, shape index: {}]
  %s3 = inlined_call_operand.vmem [shape: f32[1,96], index: 3, kind: input, shape index: {}]
  %s4 = inlined_call_operand.hbm [shape: bf16[32,96], index: 4, kind: input, shape index: {}]
  %s5 = inlined_call_operand.hbm [shape: f32[8,2,32], index: 5, kind: output, shape index: {}]
  %s6 = sld [smem:[#allocation0]]
  $region46: #{tpu_custom_call.1} parent=0
    _
  %s8 = ssub.s32 1, %s6
  %s9 = scalar_select 0, %s8, %s6
  $region1: #{tpu_custom_call.1} parent=0
    #allocation3 [shape = 'u8[1024]{0}', space=smem, size = 0x400, scoped, tag = 'input window, operand 0, single buffered']
    #allocation4 [shape = 's32[1]{0}', space=sflag, size = 0x4, scoped, tag = 'scoped memory for tpu_custom_call.1']
    #allocation5 [shape = 's32[1]{0}', space=sflag, size = 0x4, scoped, tag = 'scoped memory for tpu_custom_call.1']
    #allocation6 [shape = 's32[1]{0}', space=sflag, size = 0x4, scoped, tag = 'scoped memory for tpu_custom_call.1']
    #allocation7 [shape = 'u8[4096]{0}', space=vmem, size = 0x1000, scoped, tag = 'input window, operand 1, single buffered']
    #allocation8 [shape = 'u8[4096]{0}', space=vmem, size = 0x1000, scoped, tag = 'input window, operand 2, single buffered']
    #allocation9 [shape = 's32[1]{0}', space=sflag, size = 0x4, scoped, tag = 'scoped memory for tpu_custom_call.1']
    #allocation10 [shape = 'u8[8192]{0}', space=vmem, size = 0x2000, scoped, tag = 'input window, operand 4, single buffered']
    #allocation11 [shape = 'u8[8192]{0}', space=vmem, size = 0x2000, scoped, tag = 'output window, operand 0, single buffered']
    %10 = vsyncpa [#allocation6], 0
    %11 = vsyncpa [#allocation4], 0
    %12 = vsyncpa [#allocation9], 0
    %13 = vsyncpa [#allocation5], 0
    // Predicated region
    $region2: #{tpu_custom_call.1} parent=1 // pred_check
      _
    $region3: #{tpu_custom_call.1} parent=1 // pred_check_branch
      %15 = sbr.rel (0) target = $region5
    $region4: #{tpu_custom_call.1} parent=1 // pred_region
      %s17 = ssub.s32 32, 32
      %18 = vsyncadd [#allocation6], %s17
      %21 = dma.hbm_to_smem %s0, 32, [#allocation3], [#allocation6]
    $region5: #{tpu_custom_call.1} parent=1 // pred_fallthru
      _
    // Predicated region
    $region6: #{tpu_custom_call.1} parent=1 // pred_check
      _
    $region7: #{tpu_custom_call.1} parent=1 // pred_check_branch
      %23 = sbr.rel (0) target = $region9
    $region8: #{tpu_custom_call.1} parent=1 // pred_region
      %s25 = ssub.s32 128, 128
      %26 = vsyncadd [#allocation4], %s25
      %s27 = sshll.u32 [#allocation7], 4
      %s28 = int_to_ptr.vmem [resolvable:$true] %s27
      %33 = dma.hbm_to_vmem [thread:$0]  %s1, 128, %s28, [#allocation4], 64, 64, 4
    $region9: #{tpu_custom_call.1} parent=1 // pred_fallthru
      _
    // Predicated region
    $region10: #{tpu_custom_call.1} parent=1 // pred_check
      _
    $region11: #{tpu_custom_call.1} parent=1 // pred_check_branch
      %35 = sbr.rel (0) target = $region13
    $region12: #{tpu_custom_call.1} parent=1 // pred_region
      %s37 = ssub.s32 128, 128
      %38 = vsyncadd [#allocation9], %s37
      %s39 = sshll.u32 [#allocation8], 4
      %s40 = int_to_ptr.vmem [resolvable:$true] %s39
      %45 = dma.hbm_to_vmem [thread:$0]  %s2, 128, %s40, [#allocation9], 64, 64, 4
    $region13: #{tpu_custom_call.1} parent=1 // pred_fallthru
      _
    // Predicated region
    $region14: #{tpu_custom_call.1} parent=1 // pred_check
      _
    $region15: #{tpu_custom_call.1} parent=1 // pred_check_branch
      %47 = sbr.rel (0) target = $region17
    $region16: #{tpu_custom_call.1} parent=1 // pred_region
      _
    $region17: #{tpu_custom_call.1} parent=1 // pred_fallthru
      _
    // Predicated region
    $region18: #{tpu_custom_call.1} parent=1 // pred_check
      _
    $region19: #{tpu_custom_call.1} parent=1 // pred_check_branch
      %49 = sbr.rel (0) target = $region21
    $region20: #{tpu_custom_call.1} parent=1 // pred_region
      %s51 = ssub.s32 256, 256
      %52 = vsyncadd [#allocation9], %s51
      %s53 = sshll.u32 [#allocation10], 4
      %s54 = int_to_ptr.vmem [resolvable:$true] %s53
      %59 = dma.hbm_to_vmem [thread:$0]  %s4, 256, %s54, [#allocation9], 64, 64, 4
    $region21: #{tpu_custom_call.1} parent=1 // pred_fallthru
      _
    // Predicated region
    $region22: #{tpu_custom_call.1} parent=1 // pred_check
      _
    $region23: #{tpu_custom_call.1} parent=1 // pred_check_branch
      %61 = sbr.rel (0) target = $region25
    $region24: #{tpu_custom_call.1} parent=1 // pred_region
      %62 = dma.done [#allocation6], 32
    $region25: #{tpu_custom_call.1} parent=1 // pred_fallthru
      _
    // Predicated region
    $region26: #{tpu_custom_call.1} parent=1 // pred_check
      _
    $region27: #{tpu_custom_call.1} parent=1 // pred_check_branch
      %64 = sbr.rel (0) target = $region29
    $region28: #{tpu_custom_call.1} parent=1 // pred_region
      %65 = dma.done [#allocation4], 128
    $region29: #{tpu_custom_call.1} parent=1 // pred_fallthru
      _
    // Predicated region
    $region30: #{tpu_custom_call.1} parent=1 // pred_check
      _
    $region31: #{tpu_custom_call.1} parent=1 // pred_check_branch
      %67 = sbr.rel (0) target = $region33
    $region32: #{tpu_custom_call.1} parent=1 // pred_region
      %68 = dma.done [#allocation9], 128
    $region33: #{tpu_custom_call.1} parent=1 // pred_fallthru
      _
    // Predicated region
    $region34: #{tpu_custom_call.1} parent=1 // pred_check
      _
    $region35: #{tpu_custom_call.1} parent=1 // pred_check_branch
      %70 = sbr.rel (0) target = $region37
    $region36: #{tpu_custom_call.1} parent=1 // pred_region
      %71 = dma.done [#allocation9], 256
    $region37: #{tpu_custom_call.1} parent=1 // pred_fallthru
      _
    %72 = sfence
    %v74 = vld [vmem:[#allocation7] sm:$0xf]
    %v75 = vld [vmem:[#allocation7 + $0x4] sm:$0xf]
    %v76 = vld [vmem:[#allocation8] sm:$0xf]
    %v77 = vld [vmem:[#allocation8 + $0x4] sm:$0xf]
    %v78 = vld [vmem:[%s3] sm:$0x1]
    %v80 = vlaneseq
    %v81 = vshrl.u32 %v80, 7
    %v82 = vsub.s32 0, %v81
    %v83 = vrot.slane %v78, %v82
    %v87 = vunpack.c.l.b16 %v74
    %v88 = vunpack.c.l.b16 %v75
    %v89 = vpack.c.b16 %v88, %v87
    %v92 = vunpack.c.l.b16 %v76
    %v93 = vunpack.c.l.b16 %v77
    %v94 = vpack.c.b16 %v93, %v92
    %vm96 = vcmask 130048
    %v98 = vsel %vm96, %v89, 0
    %100 = vmatprep.subr.bf16.mxu0 0
    %101 = vmatpush1.bf16.msra.mxu0 %v94
    %102 = vmatprep.subr.bf16.mxu0 0
    %103 = vmatpush1.bf16.msra.mxu0 0
    %104 = vmatprep.subr.bf16.mxu0 0
    %105 = vmatpush1.bf16.msra.mxu0 0
    %106 = vmatprep.subr.bf16.mxu0 0
    %107 = vmatpush1.bf16.msra.mxu0 0
    %108 = vmatprep.subr.bf16.mxu0 0
    %109 = vmatpush1.bf16.msra.mxu0 0
    %110 = vmatprep.subr.bf16.mxu0 0
    %111 = vmatpush1.bf16.msra.mxu0 0
    %112 = vmatprep.subr.bf16.mxu0 0
    %113 = vmatpush1.bf16.msra.mxu0 0
    %114 = vmatprep.subr.bf16.mxu0 0
    %115 = vmatpush1.bf16.msra.mxu0 0
    %116 = vmatprep.subr.bf16.mxu0 0
    %117 = vmatpush1.bf16.msra.mxu0 0
    %118 = vmatprep.subr.bf16.mxu0 0
    %119 = vmatpush1.bf16.msra.mxu0 0
    %120 = vmatprep.subr.bf16.mxu0 0
    %121 = vmatpush1.bf16.msra.mxu0 0
    %122 = vmatprep.subr.bf16.mxu0 0
    %123 = vmatpush1.bf16.msra.mxu0 0
    %124 = vmatprep.subr.bf16.mxu0 0
    %125 = vmatpush1.bf16.msra.mxu0 0
    %126 = vmatprep.subr.bf16.mxu0 0
    %127 = vmatpush1.bf16.msra.mxu0 0
    %128 = vmatprep.subr.bf16.mxu0 0
    %129 = vmatpush1.bf16.msra.mxu0 0
    %130 = vmatprep.subr.bf16.mxu0 0
    %131 = vmatpush1.bf16.msra.mxu0 0
    %132 = vmatprep.mubr.bf16.mxu0 0
    %133 = vmatmul.mubr.bf16.gmra.mrb[0].mxu0 %v98
    %v134 = vpop.f32.mrb[0].mxu0
    %v135 = vadd.f32 %v83, %v134
    %v136 = vpop.f32.mrb[0].mxu0
    %v137 = vpop.f32.mrb[0].mxu0
    %v138 = vadd.f32 %v83, %v137
    %v139 = vpop.f32.mrb[0].mxu0
    %140 = vdwg.mxu0
    %v141 = vxor.u32 %v135, 2147483648
    %v142 = vmul.f32 %v141, 1.442695
    %v143 = vpow.pop %v142
    %v144 = vadd.f32 %v143, 1.0
    %v145 = vrcp.pop %v144
    %v146 = vmul.f32 1.0, %v145
    %v147 = vtanh.pop %v135
    %v148 = vsub.f32 1.0, %v146
    %150 = vrot.lane.b32.xlu0 %v148, 64
    %v151 = vpop.permute.xlu0 %150
    %v153 = vmul.f32 %v147, %v151
    %v154 = vtanh.pop %v153
    %156 = vrot.lane.b32.xlu0 %v154, 96
    %v157 = vpop.permute.xlu0 %156
    %v159 = vmul.f32 %v146, %v157
    %161 = vrot.lane.b32.xlu0 %v159, 96
    %v162 = vpop.permute.xlu0 %161
    %vm164 = vcmask 254976
    %165 = vst.msk [vmem:[#allocation11] sm:$0x3] %vm164, %v162
    %167 = vrot.lane.b32.xlu0 %v153, 64
    %v168 = vpop.permute.xlu0 %167
    %170 = vst.msk [vmem:[#allocation2] sm:$0x3] %vm164, %v168
    %s171 = sld [smem:[#allocation3 + $0x1]]
    %s172 = smul.u32 %s171, 2
    %s173 = scalar_lea.vmem [#allocation11], %s172
    %v174 = vld [vmem:[%s173] sm:$0x3]
    %s175 = scalar_lea.vmem [#allocation2], %s172
    %v176 = vld [vmem:[%s175] sm:$0x3]
    %s177 = sld [smem:[#allocation3 + $0x81]]
    %s178 = smul.u32 %s177, 2
    %s179 = scalar_lea.vmem [#allocation11], %s178
    %v180 = vld [vmem:[%s179] sm:$0x3]
    %s181 = scalar_lea.vmem [#allocation2], %s178
    %v182 = vld [vmem:[%s181] sm:$0x3]
    %vm183 = vcmask 1040384
    %v184 = vsel %vm183, %v174, %v180
    %v185 = vsel %vm183, %v176, %v182
    %v186 = vpack.c.bf16 %v184, %v184
    %v187 = vld [vmem:[#allocation10] sm:$0xf]
    %v188 = vld [vmem:[#allocation10 + $0x4] sm:$0xf]
    %v189 = vld [vmem:[#allocation10 + $0x8] sm:$0xf]
    %v190 = vld [vmem:[#allocation10 + $0xc] sm:$0xf]
    %v195 = vunpack.c.l.b16 %v187
    %v196 = vunpack.c.l.b16 %v188
    %v197 = vunpack.c.l.b16 %v189
    %v198 = vunpack.c.l.b16 %v190
    %v199 = vpack.c.b16 %v196, %v195
    %v200 = vpack.c.b16 %v198, %v197
    %v204 = vrot.slane %v135, 2
    %vm206 = vcmask 261120
    %v208 = vsel %vm206, %v186, 0
    %210 = vmatprep.subr.bf16.mxu0 0
    %211 = vmatpush1.bf16.msra.mxu0 %v199
    %212 = vmatprep.subr.bf16.mxu0 0
    %213 = vmatpush1.bf16.msra.mxu0 %v200
    %214 = vmatprep.subr.bf16.mxu0 0
    %215 = vmatpush1.bf16.msra.mxu0 0
    %216 = vmatprep.subr.bf16.mxu0 0
    %217 = vmatpush1.bf16.msra.mxu0 0
    %218 = vmatprep.subr.bf16.mxu0 0
    %219 = vmatpush1.bf16.msra.mxu0 0
    %220 = vmatprep.subr.bf16.mxu0 0
    %221 = vmatpush1.bf16.msra.mxu0 0
    %222 = vmatprep.subr.bf16.mxu0 0
    %223 = vmatpush1.bf16.msra.mxu0 0
    %224 = vmatprep.subr.bf16.mxu0 0
    %225 = vmatpush1.bf16.msra.mxu0 0
    %226 = vmatprep.subr.bf16.mxu0 0
    %227 = vmatpush1.bf16.msra.mxu0 0
    %228 = vmatprep.subr.bf16.mxu0 0
    %229 = vmatpush1.bf16.msra.mxu0 0
    %230 = vmatprep.subr.bf16.mxu0 0
    %231 = vmatpush1.bf16.msra.mxu0 0
    %232 = vmatprep.subr.bf16.mxu0 0
    %233 = vmatpush1.bf16.msra.mxu0 0
    %234 = vmatprep.subr.bf16.mxu0 0
    %235 = vmatpush1.bf16.msra.mxu0 0
    %236 = vmatprep.subr.bf16.mxu0 0
    %237 = vmatpush1.bf16.msra.mxu0 0
    %238 = vmatprep.subr.bf16.mxu0 0
    %239 = vmatpush1.bf16.msra.mxu0 0
    %240 = vmatprep.subr.bf16.mxu0 0
    %241 = vmatpush1.bf16.msra.mxu0 0
    %242 = vmatprep.mubr.bf16.mxu0 0
    %243 = vmatmul.mubr.bf16.gmra.mrb[0].mxu0 %v208
    %v244 = vpop.f32.mrb[0].mxu0
    %v245 = vadd.f32 %v204, %v244
    %v246 = vpop.f32.mrb[0].mxu0
    %v247 = vpop.f32.mrb[0].mxu0
    %v248 = vpop.f32.mrb[0].mxu0
    %249 = vdwg.mxu0
    %v250 = vxor.u32 %v245, 2147483648
    %v251 = vmul.f32 %v250, 1.442695
    %v252 = vpow.pop %v251
    %v253 = vadd.f32 %v252, 1.0
    %v254 = vrcp.pop %v253
    %v255 = vmul.f32 1.0, %v254
    %v256 = vtanh.pop %v245
    %v257 = vmul.f32 %v185, %v255
    %v258 = vsub.f32 1.0, %v255
    %260 = vrot.lane.b32.xlu0 %v258, 64
    %v261 = vpop.permute.xlu0 %260
    %v263 = vmul.f32 %v256, %v261
    %265 = vrot.lane.b32.xlu0 %v263, 64
    %v266 = vpop.permute.xlu0 %265
    %v268 = vadd.f32 %v257, %v266
    %v269 = vtanh.pop %v268
    %271 = vrot.lane.b32.xlu0 %v269, 32
    %v272 = vpop.permute.xlu0 %271
    %v274 = vmul.f32 %v255, %v272
    %276 = vrot.lane.b32.xlu0 %v274, 96
    %v277 = vpop.permute.xlu0 %276
    %s279 = scalar_lea.vmem [#allocation11], 2
    %280 = vst.msk [vmem:[%s279] sm:$0x3] %vm164, %v277
    %s281 = scalar_lea.vmem [#allocation2], 2
    %282 = vst.msk [vmem:[%s281] sm:$0x3] %vm164, %v268
    %s283 = sld [smem:[#allocation3 + $0x2]]
    %s284 = smul.u32 %s283, 2
    %s285 = scalar_lea.vmem [#allocation11], %s284
    %v286 = vld [vmem:[%s285] sm:$0x3]
    %s287 = scalar_lea.vmem [#allocation2], %s284
    %v288 = vld [vmem:[%s287] sm:$0x3]
    %s289 = sld [smem:[#allocation3 + $0x82]]
    %s290 = smul.u32 %s289, 2
    %s291 = scalar_lea.vmem [#allocation11], %s290
    %v292 = vld [vmem:[%s291] sm:$0x3]
    %s293 = scalar_lea.vmem [#allocation2], %s290
    %v294 = vld [vmem:[%s293] sm:$0x3]
    %v295 = vsel %vm183, %v286, %v292
    %v296 = vsel %vm183, %v288, %v294
    %v297 = vpack.c.bf16 %v295, %v295
    %v298 = vld [vmem:[#allocation10] sm:$0xf]
    %v299 = vld [vmem:[#allocation10 + $0x4] sm:$0xf]
    %v300 = vld [vmem:[#allocation10 + $0x8] sm:$0xf]
    %v301 = vld [vmem:[#allocation10 + $0xc] sm:$0xf]
    %v306 = vunpack.c.l.b16 %v298
    %v307 = vunpack.c.l.b16 %v299
    %v308 = vunpack.c.l.b16 %v300
    %v309 = vunpack.c.l.b16 %v301
    %v310 = vpack.c.b16 %v307, %v306
    %v311 = vpack.c.b16 %v309, %v308
    %v314 = vrot.slane %v135, 4
    %v317 = vsel %vm206, %v297, 0
    %319 = vmatprep.subr.bf16.mxu0 0
    %320 = vmatpush1.bf16.msra.mxu0 %v310
    %321 = vmatprep.subr.bf16.mxu0 0
    %322 = vmatpush1.bf16.msra.mxu0 %v311
    %323 = vmatprep.subr.bf16.mxu0 0
    %324 = vmatpush1.bf16.msra.mxu0 0
    %325 = vmatprep.subr.bf16.mxu0 0
    %326 = vmatpush1.bf16.msra.mxu0 0
    %327 = vmatprep.subr.bf16.mxu0 0
    %328 = vmatpush1.bf16.msra.mxu0 0
    %329 = vmatprep.subr.bf16.mxu0 0
    %330 = vmatpush1.bf16.msra.mxu0 0
    %331 = vmatprep.subr.bf16.mxu0 0
    %332 = vmatpush1.bf16.msra.mxu0 0
    %333 = vmatprep.subr.bf16.mxu0 0
    %334 = vmatpush1.bf16.msra.mxu0 0
    %335 = vmatprep.subr.bf16.mxu0 0
    %336 = vmatpush1.bf16.msra.mxu0 0
    %337 = vmatprep.subr.bf16.mxu0 0
    %338 = vmatpush1.bf16.msra.mxu0 0
    %339 = vmatprep.subr.bf16.mxu0 0
    %340 = vmatpush1.bf16.msra.mxu0 0
    %341 = vmatprep.subr.bf16.mxu0 0
    %342 = vmatpush1.bf16.msra.mxu0 0
    %343 = vmatprep.subr.bf16.mxu0 0
    %344 = vmatpush1.bf16.msra.mxu0 0
    %345 = vmatprep.subr.bf16.mxu0 0
    %346 = vmatpush1.bf16.msra.mxu0 0
    %347 = vmatprep.subr.bf16.mxu0 0
    %348 = vmatpush1.bf16.msra.mxu0 0
    %349 = vmatprep.subr.bf16.mxu0 0
    %350 = vmatpush1.bf16.msra.mxu0 0
    %351 = vmatprep.mubr.bf16.mxu0 0
    %352 = vmatmul.mubr.bf16.gmra.mrb[0].mxu0 %v317
    %v353 = vpop.f32.mrb[0].mxu0
    %v354 = vadd.f32 %v314, %v353
    %v355 = vpop.f32.mrb[0].mxu0
    %v356 = vpop.f32.mrb[0].mxu0
    %v357 = vpop.f32.mrb[0].mxu0
    %358 = vdwg.mxu0
    %v359 = vxor.u32 %v354, 2147483648
    %v360 = vmul.f32 %v359, 1.442695
    %v361 = vpow.pop %v360
    %v362 = vadd.f32 %v361, 1.0
    %v363 = vrcp.pop %v362
    %v364 = vmul.f32 1.0, %v363
    %v365 = vtanh.pop %v354
    %v366 = vmul.f32 %v296, %v364
    %v367 = vsub.f32 1.0, %v364
    %369 = vrot.lane.b32.xlu0 %v367, 64
    %v370 = vpop.permute.xlu0 %369
    %v372 = vmul.f32 %v365, %v370
    %374 = vrot.lane.b32.xlu0 %v372, 64
    %v375 = vpop.permute.xlu0 %374
    %v377 = vadd.f32 %v366, %v375
    %v378 = vtanh.pop %v377
    %380 = vrot.lane.b32.xlu0 %v378, 32
    %v381 = vpop.permute.xlu0 %380
    %v383 = vmul.f32 %v364, %v381
    %385 = vrot.lane.b32.xlu0 %v383, 96
    %v386 = vpop.permute.xlu0 %385
    %s388 = scalar_lea.vmem [#allocation11], 4
    %389 = vst.msk [vmem:[%s388] sm:$0x3] %vm164, %v386
    %s390 = scalar_lea.vmem [#allocation2], 4
    %391 = vst.msk [vmem:[%s390] sm:$0x3] %vm164, %v377
    %s392 = sld [smem:[#allocation3 + $0x3]]
    %s393 = smul.u32 %s392, 2
    %s394 = scalar_lea.vmem [#allocation11], %s393
    %v395 = vld [vmem:[%s394] sm:$0x3]
    %s396 = scalar_lea.vmem [#allocation2], %s393
    %v397 = vld [vmem:[%s396] sm:$0x3]
    %s398 = sld [smem:[#allocation3 + $0x83]]
    %s399 = smul.u32 %s398, 2
    %s400 = scalar_lea.vmem [#allocation11], %s399
    %v401 = vld [vmem:[%s400] sm:$0x3]
    %s402 = scalar_lea.vmem [#allocation2], %s399
    %v403 = vld [vmem:[%s402] sm:$0x3]
    %v404 = vsel %vm183, %v395, %v401
    %v405 = vsel %vm183, %v397, %v403
    %v406 = vpack.c.bf16 %v404, %v404
    %v407 = vld [vmem:[#allocation10] sm:$0xf]
    %v408 = vld [vmem:[#allocation10 + $0x4] sm:$0xf]
    %v409 = vld [vmem:[#allocation10 + $0x8] sm:$0xf]
    %v410 = vld [vmem:[#allocation10 + $0xc] sm:$0xf]
    %v415 = vunpack.c.l.b16 %v407
    %v416 = vunpack.c.l.b16 %v408
    %v417 = vunpack.c.l.b16 %v409
    %v418 = vunpack.c.l.b16 %v410
    %v419 = vpack.c.b16 %v416, %v415
    %v420 = vpack.c.b16 %v418, %v417
    %v423 = vrot.slane %v135, 6
    %v426 = vsel %vm206, %v406, 0
    %428 = vmatprep.subr.bf16.mxu0 0
    %429 = vmatpush1.bf16.msra.mxu0 %v419
    %430 = vmatprep.subr.bf16.mxu0 0
    %431 = vmatpush1.bf16.msra.mxu0 %v420
    %432 = vmatprep.subr.bf16.mxu0 0
    %433 = vmatpush1.bf16.msra.mxu0 0
    %434 = vmatprep.subr.bf16.mxu0 0
    %435 = vmatpush1.bf16.msra.mxu0 0
    %436 = vmatprep.subr.bf16.mxu0 0
    %437 = vmatpush1.bf16.msra.mxu0 0
    %438 = vmatprep.subr.bf16.mxu0 0
    %439 = vmatpush1.bf16.msra.mxu0 0
    %440 = vmatprep.subr.bf16.mxu0 0
    %441 = vmatpush1.bf16.msra.mxu0 0
    %442 = vmatprep.subr.bf16.mxu0 0
    %443 = vmatpush1.bf16.msra.mxu0 0
    %444 = vmatprep.subr.bf16.mxu0 0
    %445 = vmatpush1.bf16.msra.mxu0 0
    %446 = vmatprep.subr.bf16.mxu0 0
    %447 = vmatpush1.bf16.msra.mxu0 0
    %448 = vmatprep.subr.bf16.mxu0 0
    %449 = vmatpush1.bf16.msra.mxu0 0
    %450 = vmatprep.subr.bf16.mxu0 0
    %451 = vmatpush1.bf16.msra.mxu0 0
    %452 = vmatprep.subr.bf16.mxu0 0
    %453 = vmatpush1.bf16.msra.mxu0 0
    %454 = vmatprep.subr.bf16.mxu0 0
    %455 = vmatpush1.bf16.msra.mxu0 0
    %456 = vmatprep.subr.bf16.mxu0 0
    %457 = vmatpush1.bf16.msra.mxu0 0
    %458 = vmatprep.subr.bf16.mxu0 0
    %459 = vmatpush1.bf16.msra.mxu0 0
    %460 = vmatprep.mubr.bf16.mxu0 0
    %461 = vmatmul.mubr.bf16.gmra.mrb[0].mxu0 %v426
    %v462 = vpop.f32.mrb[0].mxu0
    %v463 = vadd.f32 %v423, %v462
    %v464 = vpop.f32.mrb[0].mxu0
    %v465 = vpop.f32.mrb[0].mxu0
    %v466 = vpop.f32.mrb[0].mxu0
    %467 = vdwg.mxu0
    %v468 = vxor.u32 %v463, 2147483648
    %v469 = vmul.f32 %v468, 1.442695
    %v470 = vpow.pop %v469
    %v471 = vadd.f32 %v470, 1.0
    %v472 = vrcp.pop %v471
    %v473 = vmul.f32 1.0, %v472
    %v474 = vtanh.pop %v463
    %v475 = vmul.f32 %v405, %v473
    %v476 = vsub.f32 1.0, %v473
    %478 = vrot.lane.b32.xlu0 %v476, 64
    %v479 = vpop.permute.xlu0 %478
    %v481 = vmul.f32 %v474, %v479
    %483 = vrot.lane.b32.xlu0 %v481, 64
    %v484 = vpop.permute.xlu0 %483
    %v486 = vadd.f32 %v475, %v484
    %v487 = vtanh.pop %v486
    %489 = vrot.lane.b32.xlu0 %v487, 32
    %v490 = vpop.permute.xlu0 %489
    %v492 = vmul.f32 %v473, %v490
    %494 = vrot.lane.b32.xlu0 %v492, 96
    %v495 = vpop.permute.xlu0 %494
    %s497 = scalar_lea.vmem [#allocation11], 6
    %498 = vst.msk [vmem:[%s497] sm:$0x3] %vm164, %v495
    %s499 = scalar_lea.vmem [#allocation2], 6
    %500 = vst.msk [vmem:[%s499] sm:$0x3] %vm164, %v486
    %s501 = sld [smem:[#allocation3 + $0x4]]
    %s502 = smul.u32 %s501, 2
    %s503 = scalar_lea.vmem [#allocation11], %s502
    %v504 = vld [vmem:[%s503] sm:$0x3]
    %s505 = scalar_lea.vmem [#allocation2], %s502
    %v506 = vld [vmem:[%s505] sm:$0x3]
    %s507 = sld [smem:[#allocation3 + $0x84]]
    %s508 = smul.u32 %s507, 2
    %s509 = scalar_lea.vmem [#allocation11], %s508
    %v510 = vld [vmem:[%s509] sm:$0x3]
    %s511 = scalar_lea.vmem [#allocation2], %s508
    %v512 = vld [vmem:[%s511] sm:$0x3]
    %v513 = vsel %vm183, %v504, %v510
    %v514 = vsel %vm183, %v506, %v512
    %v515 = vpack.c.bf16 %v513, %v513
    %v516 = vld [vmem:[#allocation10] sm:$0xf]
    %v517 = vld [vmem:[#allocation10 + $0x4] sm:$0xf]
    %v518 = vld [vmem:[#allocation10 + $0x8] sm:$0xf]
    %v519 = vld [vmem:[#allocation10 + $0xc] sm:$0xf]
    %v524 = vunpack.c.l.b16 %v516
    %v525 = vunpack.c.l.b16 %v517
    %v526 = vunpack.c.l.b16 %v518
    %v527 = vunpack.c.l.b16 %v519
    %v528 = vpack.c.b16 %v525, %v524
    %v529 = vpack.c.b16 %v527, %v526
    %v533 = vsel %vm206, %v515, 0
    %535 = vmatprep.subr.bf16.mxu0 0
    %536 = vmatpush1.bf16.msra.mxu0 %v528
    %537 = vmatprep.subr.bf16.mxu0 0
    %538 = vmatpush1.bf16.msra.mxu0 %v529
    %539 = vmatprep.subr.bf16.mxu0 0
    %540 = vmatpush1.bf16.msra.mxu0 0
    %541 = vmatprep.subr.bf16.mxu0 0
    %542 = vmatpush1.bf16.msra.mxu0 0
    %543 = vmatprep.subr.bf16.mxu0 0
    %544 = vmatpush1.bf16.msra.mxu0 0
    %545 = vmatprep.subr.bf16.mxu0 0
    %546 = vmatpush1.bf16.msra.mxu0 0
    %547 = vmatprep.subr.bf16.mxu0 0
    %548 = vmatpush1.bf16.msra.mxu0 0
    %549 = vmatprep.subr.bf16.mxu0 0
    %550 = vmatpush1.bf16.msra.mxu0 0
    %551 = vmatprep.subr.bf16.mxu0 0
    %552 = vmatpush1.bf16.msra.mxu0 0
    %553 = vmatprep.subr.bf16.mxu0 0
    %554 = vmatpush1.bf16.msra.mxu0 0
    %555 = vmatprep.subr.bf16.mxu0 0
    %556 = vmatpush1.bf16.msra.mxu0 0
    %557 = vmatprep.subr.bf16.mxu0 0
    %558 = vmatpush1.bf16.msra.mxu0 0
    %559 = vmatprep.subr.bf16.mxu0 0
    %560 = vmatpush1.bf16.msra.mxu0 0
    %561 = vmatprep.subr.bf16.mxu0 0
    %562 = vmatpush1.bf16.msra.mxu0 0
    %563 = vmatprep.subr.bf16.mxu0 0
    %564 = vmatpush1.bf16.msra.mxu0 0
    %565 = vmatprep.subr.bf16.mxu0 0
    %566 = vmatpush1.bf16.msra.mxu0 0
    %567 = vmatprep.mubr.bf16.mxu0 0
    %568 = vmatmul.mubr.bf16.gmra.mrb[0].mxu0 %v533
    %v569 = vpop.f32.mrb[0].mxu0
    %v570 = vadd.f32 %v138, %v569
    %v571 = vpop.f32.mrb[0].mxu0
    %v572 = vpop.f32.mrb[0].mxu0
    %v573 = vpop.f32.mrb[0].mxu0
    %574 = vdwg.mxu0
    %v575 = vxor.u32 %v570, 2147483648
    %v576 = vmul.f32 %v575, 1.442695
    %v577 = vpow.pop %v576
    %v578 = vadd.f32 %v577, 1.0
    %v579 = vrcp.pop %v578
    %v580 = vmul.f32 1.0, %v579
    %v581 = vtanh.pop %v570
    %v582 = vmul.f32 %v514, %v580
    %v583 = vsub.f32 1.0, %v580
    %585 = vrot.lane.b32.xlu0 %v583, 64
    %v586 = vpop.permute.xlu0 %585
    %v588 = vmul.f32 %v581, %v586
    %590 = vrot.lane.b32.xlu0 %v588, 64
    %v591 = vpop.permute.xlu0 %590
    %v593 = vadd.f32 %v582, %v591
    %v594 = vtanh.pop %v593
    %596 = vrot.lane.b32.xlu0 %v594, 32
    %v597 = vpop.permute.xlu0 %596
    %v599 = vmul.f32 %v580, %v597
    %601 = vrot.lane.b32.xlu0 %v599, 96
    %v602 = vpop.permute.xlu0 %601
    %s604 = scalar_lea.vmem [#allocation11], 8
    %605 = vst.msk [vmem:[%s604] sm:$0x3] %vm164, %v602
    %s606 = scalar_lea.vmem [#allocation2], 8
    %607 = vst.msk [vmem:[%s606] sm:$0x3] %vm164, %v593
    %s608 = sld [smem:[#allocation3 + $0x5]]
    %s609 = smul.u32 %s608, 2
    %s610 = scalar_lea.vmem [#allocation11], %s609
    %v611 = vld [vmem:[%s610] sm:$0x3]
    %s612 = scalar_lea.vmem [#allocation2], %s609
    %v613 = vld [vmem:[%s612] sm:$0x3]
    %s614 = sld [smem:[#allocation3 + $0x85]]
    %s615 = smul.u32 %s614, 2
    %s616 = scalar_lea.vmem [#allocation11], %s615
    %v617 = vld [vmem:[%s616] sm:$0x3]
    %s618 = scalar_lea.vmem [#allocation2], %s615
    %v619 = vld [vmem:[%s618] sm:$0x3]
    %v620 = vsel %vm183, %v611, %v617
    %v621 = vsel %vm183, %v613, %v619
    %v622 = vpack.c.bf16 %v620, %v620
    %v623 = vld [vmem:[#allocation10] sm:$0xf]
    %v624 = vld [vmem:[#allocation10 + $0x4] sm:$0xf]
    %v625 = vld [vmem:[#allocation10 + $0x8] sm:$0xf]
    %v626 = vld [vmem:[#allocation10 + $0xc] sm:$0xf]
    %v631 = vunpack.c.l.b16 %v623
    %v632 = vunpack.c.l.b16 %v624
    %v633 = vunpack.c.l.b16 %v625
    %v634 = vunpack.c.l.b16 %v626
    %v635 = vpack.c.b16 %v632, %v631
    %v636 = vpack.c.b16 %v634, %v633
    %v640 = vrot.slane %v138, 2
    %v643 = vsel %vm206, %v622, 0
    %645 = vmatprep.subr.bf16.mxu0 0
    %646 = vmatpush1.bf16.msra.mxu0 %v635
    %647 = vmatprep.subr.bf16.mxu0 0
    %648 = vmatpush1.bf16.msra.mxu0 %v636
    %649 = vmatprep.subr.bf16.mxu0 0
    %650 = vmatpush1.bf16.msra.mxu0 0
    %651 = vmatprep.subr.bf16.mxu0 0
    %652 = vmatpush1.bf16.msra.mxu0 0
    %653 = vmatprep.subr.bf16.mxu0 0
    %654 = vmatpush1.bf16.msra.mxu0 0
    %655 = vmatprep.subr.bf16.mxu0 0
    %656 = vmatpush1.bf16.msra.mxu0 0
    %657 = vmatprep.subr.bf16.mxu0 0
    %658 = vmatpush1.bf16.msra.mxu0 0
    %659 = vmatprep.subr.bf16.mxu0 0
    %660 = vmatpush1.bf16.msra.mxu0 0
    %661 = vmatprep.subr.bf16.mxu0 0
    %662 = vmatpush1.bf16.msra.mxu0 0
    %663 = vmatprep.subr.bf16.mxu0 0
    %664 = vmatpush1.bf16.msra.mxu0 0
    %665 = vmatprep.subr.bf16.mxu0 0
    %666 = vmatpush1.bf16.msra.mxu0 0
    %667 = vmatprep.subr.bf16.mxu0 0
    %668 = vmatpush1.bf16.msra.mxu0 0
    %669 = vmatprep.subr.bf16.mxu0 0
    %670 = vmatpush1.bf16.msra.mxu0 0
    %671 = vmatprep.subr.bf16.mxu0 0
    %672 = vmatpush1.bf16.msra.mxu0 0
    %673 = vmatprep.subr.bf16.mxu0 0
    %674 = vmatpush1.bf16.msra.mxu0 0
    %675 = vmatprep.subr.bf16.mxu0 0
    %676 = vmatpush1.bf16.msra.mxu0 0
    %677 = vmatprep.mubr.bf16.mxu0 0
    %678 = vmatmul.mubr.bf16.gmra.mrb[0].mxu0 %v643
    %v679 = vpop.f32.mrb[0].mxu0
    %v680 = vadd.f32 %v640, %v679
    %v681 = vpop.f32.mrb[0].mxu0
    %v682 = vpop.f32.mrb[0].mxu0
    %v683 = vpop.f32.mrb[0].mxu0
    %684 = vdwg.mxu0
    %v685 = vxor.u32 %v680, 2147483648
    %v686 = vmul.f32 %v685, 1.442695
    %v687 = vpow.pop %v686
    %v688 = vadd.f32 %v687, 1.0
    %v689 = vrcp.pop %v688
    %v690 = vmul.f32 1.0, %v689
    %v691 = vtanh.pop %v680
    %v692 = vmul.f32 %v621, %v690
    %v693 = vsub.f32 1.0, %v690
    %695 = vrot.lane.b32.xlu0 %v693, 64
    %v696 = vpop.permute.xlu0 %695
    %v698 = vmul.f32 %v691, %v696
    %700 = vrot.lane.b32.xlu0 %v698, 64
    %v701 = vpop.permute.xlu0 %700
    %v703 = vadd.f32 %v692, %v701
    %v704 = vtanh.pop %v703
    %706 = vrot.lane.b32.xlu0 %v704, 32
    %v707 = vpop.permute.xlu0 %706
    %v709 = vmul.f32 %v690, %v707
    %711 = vrot.lane.b32.xlu0 %v709, 96
    %v712 = vpop.permute.xlu0 %711
    %s714 = scalar_lea.vmem [#allocation11], 10
    %715 = vst.msk [vmem:[%s714] sm:$0x3] %vm164, %v712
    %s716 = scalar_lea.vmem [#allocation2], 10
    %717 = vst.msk [vmem:[%s716] sm:$0x3] %vm164, %v703
    %s718 = sld [smem:[#allocation3 + $0x6]]
    %s719 = smul.u32 %s718, 2
    %s720 = scalar_lea.vmem [#allocation11], %s719
    %v721 = vld [vmem:[%s720] sm:$0x3]
    %s722 = scalar_lea.vmem [#allocation2], %s719
    %v723 = vld [vmem:[%s722] sm:$0x3]
    %s724 = sld [smem:[#allocation3 + $0x86]]
    %s725 = smul.u32 %s724, 2
    %s726 = scalar_lea.vmem [#allocation11], %s725
    %v727 = vld [vmem:[%s726] sm:$0x3]
    %s728 = scalar_lea.vmem [#allocation2], %s725
    %v729 = vld [vmem:[%s728] sm:$0x3]
    %v730 = vsel %vm183, %v721, %v727
    %v731 = vsel %vm183, %v723, %v729
    %v732 = vpack.c.bf16 %v730, %v730
    %v733 = vld [vmem:[#allocation10] sm:$0xf]
    %v734 = vld [vmem:[#allocation10 + $0x4] sm:$0xf]
    %v735 = vld [vmem:[#allocation10 + $0x8] sm:$0xf]
    %v736 = vld [vmem:[#allocation10 + $0xc] sm:$0xf]
    %v741 = vunpack.c.l.b16 %v733
    %v742 = vunpack.c.l.b16 %v734
    %v743 = vunpack.c.l.b16 %v735
    %v744 = vunpack.c.l.b16 %v736
    %v745 = vpack.c.b16 %v742, %v741
    %v746 = vpack.c.b16 %v744, %v743
    %v749 = vrot.slane %v138, 4
    %v752 = vsel %vm206, %v732, 0
    %754 = vmatprep.subr.bf16.mxu0 0
    %755 = vmatpush1.bf16.msra.mxu0 %v745
    %756 = vmatprep.subr.bf16.mxu0 0
    %757 = vmatpush1.bf16.msra.mxu0 %v746
    %758 = vmatprep.subr.bf16.mxu0 0
    %759 = vmatpush1.bf16.msra.mxu0 0
    %760 = vmatprep.subr.bf16.mxu0 0
    %761 = vmatpush1.bf16.msra.mxu0 0
    %762 = vmatprep.subr.bf16.mxu0 0
    %763 = vmatpush1.bf16.msra.mxu0 0
    %764 = vmatprep.subr.bf16.mxu0 0
    %765 = vmatpush1.bf16.msra.mxu0 0
    %766 = vmatprep.subr.bf16.mxu0 0
    %767 = vmatpush1.bf16.msra.mxu0 0
    %768 = vmatprep.subr.bf16.mxu0 0
    %769 = vmatpush1.bf16.msra.mxu0 0
    %770 = vmatprep.subr.bf16.mxu0 0
    %771 = vmatpush1.bf16.msra.mxu0 0
    %772 = vmatprep.subr.bf16.mxu0 0
    %773 = vmatpush1.bf16.msra.mxu0 0
    %774 = vmatprep.subr.bf16.mxu0 0
    %775 = vmatpush1.bf16.msra.mxu0 0
    %776 = vmatprep.subr.bf16.mxu0 0
    %777 = vmatpush1.bf16.msra.mxu0 0
    %778 = vmatprep.subr.bf16.mxu0 0
    %779 = vmatpush1.bf16.msra.mxu0 0
    %780 = vmatprep.subr.bf16.mxu0 0
    %781 = vmatpush1.bf16.msra.mxu0 0
    %782 = vmatprep.subr.bf16.mxu0 0
    %783 = vmatpush1.bf16.msra.mxu0 0
    %784 = vmatprep.subr.bf16.mxu0 0
    %785 = vmatpush1.bf16.msra.mxu0 0
    %786 = vmatprep.mubr.bf16.mxu0 0
    %787 = vmatmul.mubr.bf16.gmra.mrb[0].mxu0 %v752
    %v788 = vpop.f32.mrb[0].mxu0
    %v789 = vadd.f32 %v749, %v788
    %v790 = vpop.f32.mrb[0].mxu0
    %v791 = vpop.f32.mrb[0].mxu0
    %v792 = vpop.f32.mrb[0].mxu0
    %793 = vdwg.mxu0
    %v794 = vxor.u32 %v789, 2147483648
    %v795 = vmul.f32 %v794, 1.442695
    %v796 = vpow.pop %v795
    %v797 = vadd.f32 %v796, 1.0
    %v798 = vrcp.pop %v797
    %v799 = vmul.f32 1.0, %v798
    %v800 = vtanh.pop %v789
    %v801 = vmul.f32 %v731, %v799
    %v802 = vsub.f32 1.0, %v799
    %804 = vrot.lane.b32.xlu0 %v802, 64
    %v805 = vpop.permute.xlu0 %804
    %v807 = vmul.f32 %v800, %v805
    %809 = vrot.lane.b32.xlu0 %v807, 64
    %v810 = vpop.permute.xlu0 %809
    %v812 = vadd.f32 %v801, %v810
    %v813 = vtanh.pop %v812
    %815 = vrot.lane.b32.xlu0 %v813, 32
    %v816 = vpop.permute.xlu0 %815
    %v818 = vmul.f32 %v799, %v816
    %820 = vrot.lane.b32.xlu0 %v818, 96
    %v821 = vpop.permute.xlu0 %820
    %s823 = scalar_lea.vmem [#allocation11], 12
    %824 = vst.msk [vmem:[%s823] sm:$0x3] %vm164, %v821
    %s825 = scalar_lea.vmem [#allocation2], 12
    %826 = vst.msk [vmem:[%s825] sm:$0x3] %vm164, %v812
    %s827 = sld [smem:[#allocation3 + $0x7]]
    %s828 = smul.u32 %s827, 2
    %s829 = scalar_lea.vmem [#allocation11], %s828
    %v830 = vld [vmem:[%s829] sm:$0x3]
    %s831 = scalar_lea.vmem [#allocation2], %s828
    %v832 = vld [vmem:[%s831] sm:$0x3]
    %s833 = sld [smem:[#allocation3 + $0x87]]
    %s834 = smul.u32 %s833, 2
    %s835 = scalar_lea.vmem [#allocation11], %s834
    %v836 = vld [vmem:[%s835] sm:$0x3]
    %s837 = scalar_lea.vmem [#allocation2], %s834
    %v838 = vld [vmem:[%s837] sm:$0x3]
    %v839 = vsel %vm183, %v830, %v836
    %v840 = vsel %vm183, %v832, %v838
    %v841 = vpack.c.bf16 %v839, %v839
    %v842 = vld [vmem:[#allocation10] sm:$0xf]
    %v843 = vld [vmem:[#allocation10 + $0x4] sm:$0xf]
    %v844 = vld [vmem:[#allocation10 + $0x8] sm:$0xf]
    %v845 = vld [vmem:[#allocation10 + $0xc] sm:$0xf]
    %v850 = vunpack.c.l.b16 %v842
    %v851 = vunpack.c.l.b16 %v843
    %v852 = vunpack.c.l.b16 %v844
    %v853 = vunpack.c.l.b16 %v845
    %v854 = vpack.c.b16 %v851, %v850
    %v855 = vpack.c.b16 %v853, %v852
    %v858 = vrot.slane %v138, 6
    %v861 = vsel %vm206, %v841, 0
    %863 = vmatprep.subr.bf16.mxu0 0
    %864 = vmatpush1.bf16.msra.mxu0 %v854
    %865 = vmatprep.subr.bf16.mxu0 0
    %866 = vmatpush1.bf16.msra.mxu0 %v855
    %867 = vmatprep.subr.bf16.mxu0 0
    %868 = vmatpush1.bf16.msra.mxu0 0
    %869 = vmatprep.subr.bf16.mxu0 0
    %870 = vmatpush1.bf16.msra.mxu0 0
    %871 = vmatprep.subr.bf16.mxu0 0
    %872 = vmatpush1.bf16.msra.mxu0 0
    %873 = vmatprep.subr.bf16.mxu0 0
    %874 = vmatpush1.bf16.msra.mxu0 0
    %875 = vmatprep.subr.bf16.mxu0 0
    %876 = vmatpush1.bf16.msra.mxu0 0
    %877 = vmatprep.subr.bf16.mxu0 0
    %878 = vmatpush1.bf16.msra.mxu0 0
    %879 = vmatprep.subr.bf16.mxu0 0
    %880 = vmatpush1.bf16.msra.mxu0 0
    %881 = vmatprep.subr.bf16.mxu0 0
    %882 = vmatpush1.bf16.msra.mxu0 0
    %883 = vmatprep.subr.bf16.mxu0 0
    %884 = vmatpush1.bf16.msra.mxu0 0
    %885 = vmatprep.subr.bf16.mxu0 0
    %886 = vmatpush1.bf16.msra.mxu0 0
    %887 = vmatprep.subr.bf16.mxu0 0
    %888 = vmatpush1.bf16.msra.mxu0 0
    %889 = vmatprep.subr.bf16.mxu0 0
    %890 = vmatpush1.bf16.msra.mxu0 0
    %891 = vmatprep.subr.bf16.mxu0 0
    %892 = vmatpush1.bf16.msra.mxu0 0
    %893 = vmatprep.subr.bf16.mxu0 0
    %894 = vmatpush1.bf16.msra.mxu0 0
    %895 = vmatprep.mubr.bf16.mxu0 0
    %896 = vmatmul.mubr.bf16.gmra.mrb[0].mxu0 %v861
    %v897 = vpop.f32.mrb[0].mxu0
    %v898 = vadd.f32 %v858, %v897
    %v899 = vpop.f32.mrb[0].mxu0
    %v900 = vpop.f32.mrb[0].mxu0
    %v901 = vpop.f32.mrb[0].mxu0
    %902 = vdwg.mxu0
    %v903 = vxor.u32 %v898, 2147483648
    %v904 = vmul.f32 %v903, 1.442695
    %v905 = vpow.pop %v904
    %v906 = vadd.f32 %v905, 1.0
    %v907 = vrcp.pop %v906
    %v908 = vmul.f32 1.0, %v907
    %v909 = vtanh.pop %v898
    %v910 = vmul.f32 %v840, %v908
    %v911 = vsub.f32 1.0, %v908
    %913 = vrot.lane.b32.xlu0 %v911, 64
    %v914 = vpop.permute.xlu0 %913
    %v916 = vmul.f32 %v909, %v914
    %918 = vrot.lane.b32.xlu0 %v916, 64
    %v919 = vpop.permute.xlu0 %918
    %v921 = vadd.f32 %v910, %v919
    %v922 = vtanh.pop %v921
    %924 = vrot.lane.b32.xlu0 %v922, 32
    %v925 = vpop.permute.xlu0 %924
    %v927 = vmul.f32 %v908, %v925
    %929 = vrot.lane.b32.xlu0 %v927, 96
    %v930 = vpop.permute.xlu0 %929
    %s932 = scalar_lea.vmem [#allocation11], 14
    %933 = vst.msk [vmem:[%s932] sm:$0x3] %vm164, %v930
    %s934 = scalar_lea.vmem [#allocation2], 14
    %935 = vst.msk [vmem:[%s934] sm:$0x3] %vm164, %v921
    // Predicated region
    $region38: #{tpu_custom_call.1} parent=1 // pred_check
      _
    $region39: #{tpu_custom_call.1} parent=1 // pred_check_branch
      %937 = sbr.rel (0) target = $region41
    $region40: #{tpu_custom_call.1} parent=1 // pred_region
      %s939 = ssub.s32 256, 256
      %940 = vsyncadd [#allocation5], %s939
      %s941 = sshll.u32 [#allocation11], 4
      %s942 = int_to_ptr.vmem [resolvable:$true] %s941
      %947 = dma.vmem_to_hbm [thread:$0]  %s942, 256, %s5, [#allocation5], 32, 32, 2
    $region41: #{tpu_custom_call.1} parent=1 // pred_fallthru
      _
    // Predicated region
    $region42: #{tpu_custom_call.1} parent=1 // pred_check
      _
    $region43: #{tpu_custom_call.1} parent=1 // pred_check_branch
      %949 = sbr.rel (0) target = $region45
    $region44: #{tpu_custom_call.1} parent=1 // pred_region
      %950 = dma.done [#allocation5], 256
    $region45: #{tpu_custom_call.1} parent=1 // pred_fallthru
      _
    %951 = vsyncpa [#allocation4], 1
    %952 = vsyncpa [#allocation9], 1
    %953 = vsyncpa [#allocation5], 1
    %954 = vsyncpa [#allocation6], 1

</llo_original>
